<compile_context>
chip_gen: v5e
topology: v5e:2x2
jax: 0.10.0
libtpu: 0.0.40
codegen_flags: <defaults>
</compile_context>

<pallas_src>
import functools

import jax
import jax.numpy as jnp
from jax import lax
from jax.experimental import pallas as pl
from jax.experimental.pallas import tpu as pltpu

EPS = 1e-5


# ------------------------------- Pallas kernels -------------------------------- #

def _tap_rows(a, kh, stride, ho):
    """Rows kh, kh+stride, ..., (ho of them) from a (Hp, Wc, C) value using only a
    leading-dim slice + leading-dim split reshape (no strided slices)."""
    if stride == 1:
        return a[kh:kh + ho]
    sl = a[kh:kh + stride * ho]                                 # (stride*ho, Wc, C)
    sl = sl.reshape(ho, stride, sl.shape[1], sl.shape[2])       # last two dims unchanged
    return sl[:, 0]                                             # (ho, Wc, C)


def stage_a_kernel(*refs, n_phase, stride, Ho, Wo, Cin, Cout):
    """Fused: a = ReLU(BN1(x)) (zeroed at conv padding), then
         y1 = Conv3x3(a,  w1, stride)   and   ys = Conv3x3(x, ws, stride)
       evaluated directly at the strided output resolution.
       x arrives as `n_phase` column-phase slices of the zero-padded image."""
    x_phase = refs[:n_phase]
    m_phase = refs[n_phase:2 * n_phase]
    s1_ref, h1_ref, w1_ref, b1_ref, ws_ref, bs_ref = refs[2 * n_phase:2 * n_phase + 6]
    y1_ref, ys_ref = refs[2 * n_phase + 6:]

    s1 = s1_ref[...]          # (1, 1, Cin) folded BN1 scale
    h1 = h1_ref[...]          # (1, 1, Cin) folded BN1 shift
    M = Ho * Wo

    xs, acts = [], []
    for j in range(n_phase):
        xj = x_phase[j][0]                                      # (Hp, Wc, Cin) raw padded x
        # fused BN1 + ReLU; mask zeroes the conv zero-padding positions
        aj = m_phase[j][...] * jnp.maximum(xj * s1 + h1, 0.0)
        xs.append(xj)
        acts.append(aj)

    acc1 = jnp.zeros((M, Cout), jnp.float32)                    # conv1 accumulator
    accs = jnp.zeros((M, Cout), jnp.float32)                    # skip-conv accumulator
    for kh in range(3):
        for kw in range(3):
            ph = kw % stride                                    # column phase of this tap
            c0 = kw // stride                                   # column offset inside phase
            a_rows = _tap_rows(acts[ph], kh, stride, Ho)        # (Ho, Wc, Cin)
            x_rows = _tap_rows(xs[ph], kh, stride, Ho)
            a_tap = a_rows[:, c0:c0 + Wo, :].reshape(M, Cin)
            x_tap = x_rows[:, c0:c0 + Wo, :].reshape(M, Cin)
            acc1 = acc1 + jnp.dot(a_tap, w1_ref[kh, kw],
                                  preferred_element_type=jnp.float32)
            accs = accs + jnp.dot(x_tap, ws_ref[kh, kw],
                                  preferred_element_type=jnp.float32)

    y1_ref[0] = (acc1 + b1_ref[...]).reshape(Ho, Wo, Cout).astype(y1_ref.dtype)
    ys_ref[0] = (accs + bs_ref[...]).reshape(Ho, Wo, Cout).astype(ys_ref.dtype)


def stage_b_kernel(y1p_ref, m_ref, ys_ref, s2_ref, h2_ref, s3_ref, h3_ref,
                   w2_ref, b2_ref, o_ref, *, Ho, Wo, Cout):
    """Fused: a2 = ReLU(BN2(y1)) (zeroed at conv padding); y2 = Conv3x3(a2, w2, stride 1);
       out = y2 + (folded BN3 applied to the skip-conv output)."""
    y1p = y1p_ref[0]                                            # (H1p, W1p, Cout)
    a2 = m_ref[...] * jnp.maximum(y1p * s2_ref[...] + h2_ref[...], 0.0)

    M = Ho * Wo
    acc = jnp.zeros((M, Cout), jnp.float32)
    for kh in range(3):
        for kw in range(3):
            tap = a2[kh:kh + Ho, kw:kw + Wo, :].reshape(M, Cout)
            acc = acc + jnp.dot(tap, w2_ref[kh, kw],
                                preferred_element_type=jnp.float32)

    y2 = (acc + b2_ref[...]).reshape(Ho, Wo, Cout)
    skip = ys_ref[0] * s3_ref[...] + h3_ref[...]                # folded BN3 on skip conv
    o_ref[0] = (y2 + skip).astype(o_ref.dtype)


# ------------------------------------ glue -------------------------------------- #

def _bn_fold(t, gamma, beta, axes):
    m = jnp.mean(t, axis=axes)
    v = jnp.var(t, axis=axes)                                   # biased variance (PyTorch BN)
    scale = gamma * lax.rsqrt(v + EPS)
    shift = beta - m * scale
    return scale, shift


def residual_block_forward(x_nchw, params, stride, padding):
    N, Cin, H, W = x_nchw.shape
    Cout = params["w1"].shape[-1]
    s, p = stride, padding
    f32 = jnp.float32

    H1 = (H + 2 * p - 3) // s + 1
    W1 = (W + 2 * p - 3) // s + 1
    H2 = H1 + 2 * p - 2
    W2 = W1 + 2 * p - 2
    assert (H2, W2) == (H1, W1), "residual add needs matching spatial sizes (padding=1)"

    x = jnp.transpose(x_nchw, (0, 2, 3, 1)).astype(f32)         # NCHW -> NHWC

    # ---- BN1 folded from batch statistics ----
    sc1, sh1 = _bn_fold(x, params["g1"], params["be1"], axes=(0, 1, 2))

    # ---- pad x once (shared by conv1 and skip conv); extra rows/cols only so the
    #      in-kernel stride decomposition always uses full-length contiguous slices ----
    if s > 1:
        Wc = (2 // s) + W1
        wp_alloc = s * max(Wc, -(-(W + 2 * p) // s))
        ew = wp_alloc - (W + 2 * p)
        eh = max(0, 2 + s * H1 - (H + 2 * p))
    else:
        eh = ew = 0
    x_pad = jnp.pad(x, ((0, 0), (p, p + eh), (p, p + ew), (0, 0)))

    # column-phase decomposition (strided slicing kept in XLA glue, not in the kernel)
    phases = [x_pad[:, :, j::s, :] for j in range(s)] if s > 1 else [x_pad]
    Hp, Wc = phases[0].shape[1], phases[0].shape[2]

    # per-phase interior masks (1 where the padded position holds real image data)
    hh = jnp.arange(Hp)
    in_h = ((hh >= p) & (hh < p + H)).astype(f32)
    masks = []
    for j in range(len(phases)):
        ww = jnp.arange(Wc) * s + j
        in_w = ((ww >= p) & (ww < p + W)).astype(f32)
        m2d = in_h[:, None] * in_w[None, :]
        masks.append(jnp.broadcast_to(m2d[:, :, None], (Hp, Wc, Cin)))

    M1 = H1 * W1
    kernel_a = functools.partial(stage_a_kernel, n_phase=len(phases), stride=s,
                                 Ho=H1, Wo=W1, Cin=Cin, Cout=Cout)

    in_specs_a = []
    for _ in phases:
        in_specs_a.append(pl.BlockSpec((1, Hp, Wc, Cin), lambda n: (n, 0, 0, 0)))
    for _ in phases:
        in_specs_a.append(pl.BlockSpec((Hp, Wc, Cin), lambda n: (0, 0, 0)))
    in_specs_a += [
        pl.BlockSpec((1, 1, Cin), lambda n: (0, 0, 0)),
        pl.BlockSpec((1, 1, Cin), lambda n: (0, 0, 0)),
        pl.BlockSpec((3, 3, Cin, Cout), lambda n: (0, 0, 0, 0)),
        pl.BlockSpec((1, Cout), lambda n: (0, 0)),
        pl.BlockSpec((3, 3, Cin, Cout), lambda n: (0, 0, 0, 0)),
        pl.BlockSpec((1, Cout), lambda n: (0, 0)),
    ]

    flops_a = 2 * N * M1 * 9 * Cin * Cout * 2
    bytes_a = 4 * (N * Hp * Wc * Cin * len(phases) + Hp * Wc * Cin * len(phases)
                   + 2 * 9 * Cin * Cout + 2 * Cout + 2 * Cin
                   + 2 * N * M1 * Cout)

    y1, ys = pl.pallas_call(
        kernel_a,
        out_shape=(jax.ShapeDtypeStruct((N, H1, W1, Cout), f32),
                   jax.ShapeDtypeStruct((N, H1, W1, Cout), f32)),
        grid=(N,),
        in_specs=in_specs_a,
        out_specs=(pl.BlockSpec((1, H1, W1, Cout), lambda n: (n, 0, 0, 0)),
                   pl.BlockSpec((1, H1, W1, Cout), lambda n: (n, 0, 0, 0))),
        compiler_params=pltpu.CompilerParams(dimension_semantics=("parallel",)),
        cost_estimate=pl.CostEstimate(flops=flops_a, transcendentals=0,
                                      bytes_accessed=bytes_a),
    )(*phases, *masks,
      sc1.reshape(1, 1, Cin).astype(f32), sh1.reshape(1, 1, Cin).astype(f32),
      params["w1"].astype(f32), params["b1"].reshape(1, Cout).astype(f32),
      params["ws"].astype(f32), params["bs"].reshape(1, Cout).astype(f32))

    # ---- BN2 (on conv1 output) and BN3 (on skip-conv output) folded in glue ----
    sc2, sh2 = _bn_fold(y1, params["g2"], params["be2"], axes=(0, 1, 2))
    sc3, sh3 = _bn_fold(ys, params["g3"], params["be3"], axes=(0, 1, 2))

    y1_pad = jnp.pad(y1, ((0, 0), (p, p), (p, p), (0, 0)))
    H1p, W1p = H1 + 2 * p, W1 + 2 * p

    hh = jnp.arange(H1p)
    ww = jnp.arange(W1p)
    in_h2 = ((hh >= p) & (hh < p + H1)).astype(f32)
    in_w2 = ((ww >= p) & (ww < p + W1)).astype(f32)
    mask_b = jnp.broadcast_to((in_h2[:, None] * in_w2[None, :])[:, :, None],
                              (H1p, W1p, Cout))

    kernel_b = functools.partial(stage_b_kernel, Ho=H2, Wo=W2, Cout=Cout)

    flops_b = 2 * N * H2 * W2 * 9 * Cout * Cout
    bytes_b = 4 * (N * H1p * W1p * Cout + H1p * W1p * Cout
                   + 2 * N * H2 * W2 * Cout + 9 * Cout * Cout + 5 * Cout)

    out_nhwc = pl.pallas_call(
        kernel_b,
        out_shape=jax.ShapeDtypeStruct((N, H2, W2, Cout), f32),
        grid=(N,),
        in_specs=[
            pl.BlockSpec((1, H1p, W1p, Cout), lambda n: (n, 0, 0, 0)),
            pl.BlockSpec((H1p, W1p, Cout), lambda n: (0, 0, 0)),
            pl.BlockSpec((1, H2, W2, Cout), lambda n: (n, 0, 0, 0)),
            pl.BlockSpec((1, 1, Cout), lambda n: (0, 0, 0)),
            pl.BlockSpec((1, 1, Cout), lambda n: (0, 0, 0)),
            pl.BlockSpec((1, 1, Cout), lambda n: (0, 0, 0)),
            pl.BlockSpec((1, 1, Cout), lambda n: (0, 0, 0)),
            pl.BlockSpec((3, 3, Cout, Cout), lambda n: (0, 0, 0, 0)),
            pl.BlockSpec((1, Cout), lambda n: (0, 0)),
        ],
        out_specs=pl.BlockSpec((1, H2, W2, Cout), lambda n: (n, 0, 0, 0)),
        compiler_params=pltpu.CompilerParams(dimension_semantics=("parallel",)),
        cost_estimate=pl.CostEstimate(flops=flops_b, transcendentals=0,
                                      bytes_accessed=bytes_b),
    )(y1_pad, mask_b, ys,
      sc2.reshape(1, 1, Cout).astype(f32), sh2.reshape(1, 1, Cout).astype(f32),
      sc3.reshape(1, 1, Cout).astype(f32), sh3.reshape(1, 1, Cout).astype(f32),
      params["w2"].astype(f32), params["b2"].reshape(1, Cout).astype(f32))

    return jnp.transpose(out_nhwc, (0, 3, 1, 2))                # NHWC -> NCHW


# ----------------------------- pure-JAX reference -------------------------------- #

def reference_forward(x, params, stride, padding):
    p = padding

    def bn(t, g, b):
        m = jnp.mean(t, axis=(0, 2, 3), keepdims=True)
        v = jnp.var(t, axis=(0, 2, 3), keepdims=True)
        return (t - m) / jnp.sqrt(v + EPS) * g.reshape(1, -1, 1, 1) + b.reshape(1, -1, 1, 1)

    def conv(t, w_hwio, bias, st):
        w = jnp.transpose(w_hwio, (3, 2, 0, 1))                 # HWIO -> OIHW
        y = lax.conv_general_dilated(t, w, (st, st), [(p, p), (p, p)],
                                     dimension_numbers=("NCHW", "OIHW", "NCHW"))
        return y + bias.reshape(1, -1, 1, 1)

    a = jax.nn.relu(bn(x, params["g1"], params["be1"]))
    y1 = conv(a, params["w1"], params["b1"], stride)
    a2 = jax.nn.relu(bn(y1, params["g2"], params["be2"]))
    y2 = conv(a2, params["w2"], params["b2"], 1)
    ys = conv(x, params["ws"], params["bs"], stride)
    return y2 + bn(ys, params["g3"], params["be3"])


# -------------------------------------- main -------------------------------------- #

if __name__ == "__main__":
    key = jax.random.PRNGKey(0)
    ks = jax.random.split(key, 13)

    N, Cin, H, W = 2, 4, 16, 16
    Cout = 8
    stride, padding = 2, 1

    params = {
        "g1": jax.random.normal(ks[0], (Cin,), jnp.float32) * 0.1 + 1.0,
        "be1": jax.random.normal(ks[1], (Cin,), jnp.float32) * 0.1,
        "w1": jax.random.normal(ks[2], (3, 3, Cin, Cout), jnp.float32) * 0.2,
        "b1": jax.random.normal(ks[3], (Cout,), jnp.float32) * 0.1,
        "g2": jax.random.normal(ks[4], (Cout,), jnp.float32) * 0.1 + 1.0,
        "be2": jax.random.normal(ks[5], (Cout,), jnp.float32) * 0.1,
        "w2": jax.random.normal(ks[6], (3, 3, Cout, Cout), jnp.float32) * 0.2,
        "b2": jax.random.normal(ks[7], (Cout,), jnp.float32) * 0.1,
        "ws": jax.random.normal(ks[8], (3, 3, Cin, Cout), jnp.float32) * 0.2,
        "bs": jax.random.normal(ks[9], (Cout,), jnp.float32) * 0.1,
        "g3": jax.random.normal(ks[10], (Cout,), jnp.float32) * 0.1 + 1.0,
        "be3": jax.random.normal(ks[11], (Cout,), jnp.float32) * 0.1,
    }

    x = jax.random.normal(ks[12], (N, Cin, H, W), jnp.float32)

    out = jax.block_until_ready(residual_block_forward(x, params, stride, padding))
    ref = jax.block_until_ready(reference_forward(x, params, stride, padding))

    assert out.shape == ref.shape, (out.shape, ref.shape)
    err = float(jnp.max(jnp.abs(out - ref)))
    assert jnp.allclose(out, ref, atol=1e-4, rtol=1e-4), err

    print("KERNEL_OK")
</pallas_src>

<mosaic_0001>
module attributes {stable_mosaic.version = 11 : i64} {
  func.func @stage_a_kernel(%arg0: i32, %arg1: memref<1x18x9x4xf32, #tpu.memory_space<vmem>>, %arg2: memref<1x18x9x4xf32, #tpu.memory_space<vmem>>, %arg3: memref<18x9x4xf32, #tpu.memory_space<vmem>>, %arg4: memref<18x9x4xf32, #tpu.memory_space<vmem>>, %arg5: memref<1x1x4xf32, #tpu.memory_space<vmem>>, %arg6: memref<1x1x4xf32, #tpu.memory_space<vmem>>, %arg7: memref<3x3x4x8xf32, #tpu.memory_space<vmem>>, %arg8: memref<1x8xf32, #tpu.memory_space<vmem>>, %arg9: memref<3x3x4x8xf32, #tpu.memory_space<vmem>>, %arg10: memref<1x8xf32, #tpu.memory_space<vmem>>, %arg11: memref<1x8x8x8xf32, #tpu.memory_space<vmem>>, %arg12: memref<1x8x8x8xf32, #tpu.memory_space<vmem>>) attributes {dimension_semantics = [#tpu.dimension_semantics<parallel>], iteration_bounds = array<i64: 2>, scalar_prefetch = 0 : i64, scratch_operands = 0 : i64, tpu.core_type = #tpu.core_type<tc>, window_params = [{transform_indices = @transform_0, window_bounds = array<i64: 1, 18, 9, 4>}, {transform_indices = @transform_1, window_bounds = array<i64: 1, 18, 9, 4>}, {pipeline_mode = #tpu.pipeline_mode<synchronous>, transform_indices = @transform_2, window_bounds = array<i64: 18, 9, 4>}, {pipeline_mode = #tpu.pipeline_mode<synchronous>, transform_indices = @transform_3, window_bounds = array<i64: 18, 9, 4>}, {pipeline_mode = #tpu.pipeline_mode<synchronous>, transform_indices = @transform_4, window_bounds = array<i64: 1, 1, 4>}, {pipeline_mode = #tpu.pipeline_mode<synchronous>, transform_indices = @transform_5, window_bounds = array<i64: 1, 1, 4>}, {pipeline_mode = #tpu.pipeline_mode<synchronous>, transform_indices = @transform_6, window_bounds = array<i64: 3, 3, 4, 8>}, {pipeline_mode = #tpu.pipeline_mode<synchronous>, transform_indices = @transform_7, window_bounds = array<i64: 1, 8>}, {pipeline_mode = #tpu.pipeline_mode<synchronous>, transform_indices = @transform_8, window_bounds = array<i64: 3, 3, 4, 8>}, {pipeline_mode = #tpu.pipeline_mode<synchronous>, transform_indices = @transform_9, window_bounds = array<i64: 1, 8>}, {transform_indices = @transform_10, window_bounds = array<i64: 1, 8, 8, 8>}, {transform_indices = @transform_11, window_bounds = array<i64: 1, 8, 8, 8>}]} {
    %c0 = arith.constant 0 : index
    %c0_0 = arith.constant 0 : index
    %c0_1 = arith.constant 0 : index
    %0 = vector.load %arg5[%c0, %c0_0, %c0_1] : memref<1x1x4xf32, #tpu.memory_space<vmem>>, vector<1x1x4xf32>
    %c0_2 = arith.constant 0 : index
    %c0_3 = arith.constant 0 : index
    %c0_4 = arith.constant 0 : index
    %1 = vector.load %arg6[%c0_2, %c0_3, %c0_4] : memref<1x1x4xf32, #tpu.memory_space<vmem>>, vector<1x1x4xf32>
    %c0_5 = arith.constant 0 : index
    %c0_6 = arith.constant 0 : index
    %c0_7 = arith.constant 0 : index
    %c0_8 = arith.constant 0 : index
    %2 = vector.load %arg1[%c0_5, %c0_6, %c0_7, %c0_8] : memref<1x18x9x4xf32, #tpu.memory_space<vmem>>, vector<1x18x9x4xf32>
    %3 = vector.shape_cast %2 : vector<1x18x9x4xf32> to vector<18x9x4xf32>
    %c0_9 = arith.constant 0 : index
    %c0_10 = arith.constant 0 : index
    %c0_11 = arith.constant 0 : index
    %4 = vector.load %arg3[%c0_9, %c0_10, %c0_11] : memref<18x9x4xf32, #tpu.memory_space<vmem>>, vector<18x9x4xf32>
    %5 = vector.broadcast %0 : vector<1x1x4xf32> to vector<18x9x4xf32>
    %6 = arith.mulf %3, %5 : vector<18x9x4xf32>
    %7 = vector.broadcast %1 : vector<1x1x4xf32> to vector<18x9x4xf32>
    %8 = arith.addf %6, %7 : vector<18x9x4xf32>
    %cst = arith.constant 0.000000e+00 : f32
    %9 = vector.broadcast %cst : f32 to vector<18x9x4xf32>
    %10 = arith.maximumf %8, %9 : vector<18x9x4xf32>
    %11 = arith.mulf %4, %10 : vector<18x9x4xf32>
    %c0_12 = arith.constant 0 : index
    %c0_13 = arith.constant 0 : index
    %c0_14 = arith.constant 0 : index
    %c0_15 = arith.constant 0 : index
    %12 = vector.load %arg2[%c0_12, %c0_13, %c0_14, %c0_15] : memref<1x18x9x4xf32, #tpu.memory_space<vmem>>, vector<1x18x9x4xf32>
    %13 = vector.shape_cast %12 : vector<1x18x9x4xf32> to vector<18x9x4xf32>
    %c0_16 = arith.constant 0 : index
    %c0_17 = arith.constant 0 : index
    %c0_18 = arith.constant 0 : index
    %14 = vector.load %arg4[%c0_16, %c0_17, %c0_18] : memref<18x9x4xf32, #tpu.memory_space<vmem>>, vector<18x9x4xf32>
    %15 = vector.broadcast %0 : vector<1x1x4xf32> to vector<18x9x4xf32>
    %16 = arith.mulf %13, %15 : vector<18x9x4xf32>
    %17 = vector.broadcast %1 : vector<1x1x4xf32> to vector<18x9x4xf32>
    %18 = arith.addf %16, %17 : vector<18x9x4xf32>
    %cst_19 = arith.constant 0.000000e+00 : f32
    %19 = vector.broadcast %cst_19 : f32 to vector<18x9x4xf32>
    %20 = arith.maximumf %18, %19 : vector<18x9x4xf32>
    %21 = arith.mulf %14, %20 : vector<18x9x4xf32>
    %cst_20 = arith.constant 0.000000e+00 : f32
    %22 = vector.broadcast %cst_20 : f32 to vector<64x8xf32>
    %cst_21 = arith.constant 0.000000e+00 : f32
    %23 = vector.broadcast %cst_21 : f32 to vector<64x8xf32>
    %24 = vector.extract_strided_slice %11 {offsets = [0, 0, 0], sizes = [16, 9, 4], strides = [1, 1, 1]} : vector<18x9x4xf32> to vector<16x9x4xf32>
    %25 = vector.shape_cast %24 : vector<16x9x4xf32> to vector<8x2x9x4xf32>
    %26 = vector.extract_strided_slice %25 {offsets = [0, 0, 0, 0], sizes = [8, 1, 9, 4], strides = [1, 1, 1, 1]} : vector<8x2x9x4xf32> to vector<8x1x9x4xf32>
    %27 = vector.shape_cast %26 : vector<8x1x9x4xf32> to vector<8x9x4xf32>
    %28 = vector.extract_strided_slice %3 {offsets = [0, 0, 0], sizes = [16, 9, 4], strides = [1, 1, 1]} : vector<18x9x4xf32> to vector<16x9x4xf32>
    %29 = vector.shape_cast %28 : vector<16x9x4xf32> to vector<8x2x9x4xf32>
    %30 = vector.extract_strided_slice %29 {offsets = [0, 0, 0, 0], sizes = [8, 1, 9, 4], strides = [1, 1, 1, 1]} : vector<8x2x9x4xf32> to vector<8x1x9x4xf32>
    %31 = vector.shape_cast %30 : vector<8x1x9x4xf32> to vector<8x9x4xf32>
    %32 = vector.extract_strided_slice %27 {offsets = [0, 0, 0], sizes = [8, 8, 4], strides = [1, 1, 1]} : vector<8x9x4xf32> to vector<8x8x4xf32>
    %33 = vector.shape_cast %32 : vector<8x8x4xf32> to vector<64x4xf32>
    %34 = vector.extract_strided_slice %31 {offsets = [0, 0, 0], sizes = [8, 8, 4], strides = [1, 1, 1]} : vector<8x9x4xf32> to vector<8x8x4xf32>
    %35 = vector.shape_cast %34 : vector<8x8x4xf32> to vector<64x4xf32>
    %c0_22 = arith.constant 0 : index
    %c0_23 = arith.constant 0 : index
    %c0_24 = arith.constant 0 : index
    %c0_25 = arith.constant 0 : index
    %36 = vector.load %arg7[%c0_22, %c0_23, %c0_24, %c0_25] : memref<3x3x4x8xf32, #tpu.memory_space<vmem>>, vector<1x1x4x8xf32>
    %37 = vector.shape_cast %36 : vector<1x1x4x8xf32> to vector<4x8xf32>
    %cst_26 = arith.constant dense<0.000000e+00> : vector<64x8xf32>
    %38 = tpu.matmul %33, %37, %cst_26 {dimension_numbers = #tpu.dot_dimension_numbers<[1], [0], [0], [1], [0, 0, 1, 1], [], []>} : vector<64x4xf32>, vector<4x8xf32>, vector<64x8xf32> -> vector<64x8xf32>
    %39 = arith.addf %22, %38 : vector<64x8xf32>
    %c0_27 = arith.constant 0 : index
    %c0_28 = arith.constant 0 : index
    %c0_29 = arith.constant 0 : index
    %c0_30 = arith.constant 0 : index
    %40 = vector.load %arg9[%c0_27, %c0_28, %c0_29, %c0_30] : memref<3x3x4x8xf32, #tpu.memory_space<vmem>>, vector<1x1x4x8xf32>
    %41 = vector.shape_cast %40 : vector<1x1x4x8xf32> to vector<4x8xf32>
    %cst_31 = arith.constant dense<0.000000e+00> : vector<64x8xf32>
    %42 = tpu.matmul %35, %41, %cst_31 {dimension_numbers = #tpu.dot_dimension_numbers<[1], [0], [0], [1], [0, 0, 1, 1], [], []>} : vector<64x4xf32>, vector<4x8xf32>, vector<64x8xf32> -> vector<64x8xf32>
    %43 = arith.addf %23, %42 : vector<64x8xf32>
    %44 = vector.extract_strided_slice %21 {offsets = [0, 0, 0], sizes = [16, 9, 4], strides = [1, 1, 1]} : vector<18x9x4xf32> to vector<16x9x4xf32>
    %45 = vector.shape_cast %44 : vector<16x9x4xf32> to vector<8x2x9x4xf32>
    %46 = vector.extract_strided_slice %45 {offsets = [0, 0, 0, 0], sizes = [8, 1, 9, 4], strides = [1, 1, 1, 1]} : vector<8x2x9x4xf32> to vector<8x1x9x4xf32>
    %47 = vector.shape_cast %46 : vector<8x1x9x4xf32> to vector<8x9x4xf32>
    %48 = vector.extract_strided_slice %13 {offsets = [0, 0, 0], sizes = [16, 9, 4], strides = [1, 1, 1]} : vector<18x9x4xf32> to vector<16x9x4xf32>
    %49 = vector.shape_cast %48 : vector<16x9x4xf32> to vector<8x2x9x4xf32>
    %50 = vector.extract_strided_slice %49 {offsets = [0, 0, 0, 0], sizes = [8, 1, 9, 4], strides = [1, 1, 1, 1]} : vector<8x2x9x4xf32> to vector<8x1x9x4xf32>
    %51 = vector.shape_cast %50 : vector<8x1x9x4xf32> to vector<8x9x4xf32>
    %52 = vector.extract_strided_slice %47 {offsets = [0, 0, 0], sizes = [8, 8, 4], strides = [1, 1, 1]} : vector<8x9x4xf32> to vector<8x8x4xf32>
    %53 = vector.shape_cast %52 : vector<8x8x4xf32> to vector<64x4xf32>
    %54 = vector.extract_strided_slice %51 {offsets = [0, 0, 0], sizes = [8, 8, 4], strides = [1, 1, 1]} : vector<8x9x4xf32> to vector<8x8x4xf32>
    %55 = vector.shape_cast %54 : vector<8x8x4xf32> to vector<64x4xf32>
    %c0_32 = arith.constant 0 : index
    %c1 = arith.constant 1 : index
    %c0_33 = arith.constant 0 : index
    %c0_34 = arith.constant 0 : index
    %56 = vector.load %arg7[%c0_32, %c1, %c0_33, %c0_34] : memref<3x3x4x8xf32, #tpu.memory_space<vmem>>, vector<1x1x4x8xf32>
    %57 = vector.shape_cast %56 : vector<1x1x4x8xf32> to vector<4x8xf32>
    %cst_35 = arith.constant dense<0.000000e+00> : vector<64x8xf32>
    %58 = tpu.matmul %53, %57, %cst_35 {dimension_numbers = #tpu.dot_dimension_numbers<[1], [0], [0], [1], [0, 0, 1, 1], [], []>} : vector<64x4xf32>, vector<4x8xf32>, vector<64x8xf32> -> vector<64x8xf32>
    %59 = arith.addf %39, %58 : vector<64x8xf32>
    %c0_36 = arith.constant 0 : index
    %c1_37 = arith.constant 1 : index
    %c0_38 = arith.constant 0 : index
    %c0_39 = arith.constant 0 : index
    %60 = vector.load %arg9[%c0_36, %c1_37, %c0_38, %c0_39] : memref<3x3x4x8xf32, #tpu.memory_space<vmem>>, vector<1x1x4x8xf32>
    %61 = vector.shape_cast %60 : vector<1x1x4x8xf32> to vector<4x8xf32>
    %cst_40 = arith.constant dense<0.000000e+00> : vector<64x8xf32>
    %62 = tpu.matmul %55, %61, %cst_40 {dimension_numbers = #tpu.dot_dimension_numbers<[1], [0], [0], [1], [0, 0, 1, 1], [], []>} : vector<64x4xf32>, vector<4x8xf32>, vector<64x8xf32> -> vector<64x8xf32>
    %63 = arith.addf %43, %62 : vector<64x8xf32>
    %64 = vector.extract_strided_slice %11 {offsets = [0, 0, 0], sizes = [16, 9, 4], strides = [1, 1, 1]} : vector<18x9x4xf32> to vector<16x9x4xf32>
    %65 = vector.shape_cast %64 : vector<16x9x4xf32> to vector<8x2x9x4xf32>
    %66 = vector.extract_strided_slice %65 {offsets = [0, 0, 0, 0], sizes = [8, 1, 9, 4], strides = [1, 1, 1, 1]} : vector<8x2x9x4xf32> to vector<8x1x9x4xf32>
    %67 = vector.shape_cast %66 : vector<8x1x9x4xf32> to vector<8x9x4xf32>
    %68 = vector.extract_strided_slice %3 {offsets = [0, 0, 0], sizes = [16, 9, 4], strides = [1, 1, 1]} : vector<18x9x4xf32> to vector<16x9x4xf32>
    %69 = vector.shape_cast %68 : vector<16x9x4xf32> to vector<8x2x9x4xf32>
    %70 = vector.extract_strided_slice %69 {offsets = [0, 0, 0, 0], sizes = [8, 1, 9, 4], strides = [1, 1, 1, 1]} : vector<8x2x9x4xf32> to vector<8x1x9x4xf32>
    %71 = vector.shape_cast %70 : vector<8x1x9x4xf32> to vector<8x9x4xf32>
    %72 = vector.extract_strided_slice %67 {offsets = [0, 1, 0], sizes = [8, 8, 4], strides = [1, 1, 1]} : vector<8x9x4xf32> to vector<8x8x4xf32>
    %73 = vector.shape_cast %72 : vector<8x8x4xf32> to vector<64x4xf32>
    %74 = vector.extract_strided_slice %71 {offsets = [0, 1, 0], sizes = [8, 8, 4], strides = [1, 1, 1]} : vector<8x9x4xf32> to vector<8x8x4xf32>
    %75 = vector.shape_cast %74 : vector<8x8x4xf32> to vector<64x4xf32>
    %c0_41 = arith.constant 0 : index
    %c2 = arith.constant 2 : index
    %c0_42 = arith.constant 0 : index
    %c0_43 = arith.constant 0 : index
    %76 = vector.load %arg7[%c0_41, %c2, %c0_42, %c0_43] : memref<3x3x4x8xf32, #tpu.memory_space<vmem>>, vector<1x1x4x8xf32>
    %77 = vector.shape_cast %76 : vector<1x1x4x8xf32> to vector<4x8xf32>
    %cst_44 = arith.constant dense<0.000000e+00> : vector<64x8xf32>
    %78 = tpu.matmul %73, %77, %cst_44 {dimension_numbers = #tpu.dot_dimension_numbers<[1], [0], [0], [1], [0, 0, 1, 1], [], []>} : vector<64x4xf32>, vector<4x8xf32>, vector<64x8xf32> -> vector<64x8xf32>
    %79 = arith.addf %59, %78 : vector<64x8xf32>
    %c0_45 = arith.constant 0 : index
    %c2_46 = arith.constant 2 : index
    %c0_47 = arith.constant 0 : index
    %c0_48 = arith.constant 0 : index
    %80 = vector.load %arg9[%c0_45, %c2_46, %c0_47, %c0_48] : memref<3x3x4x8xf32, #tpu.memory_space<vmem>>, vector<1x1x4x8xf32>
    %81 = vector.shape_cast %80 : vector<1x1x4x8xf32> to vector<4x8xf32>
    %cst_49 = arith.constant dense<0.000000e+00> : vector<64x8xf32>
    %82 = tpu.matmul %75, %81, %cst_49 {dimension_numbers = #tpu.dot_dimension_numbers<[1], [0], [0], [1], [0, 0, 1, 1], [], []>} : vector<64x4xf32>, vector<4x8xf32>, vector<64x8xf32> -> vector<64x8xf32>
    %83 = arith.addf %63, %82 : vector<64x8xf32>
    %84 = vector.extract_strided_slice %11 {offsets = [1, 0, 0], sizes = [16, 9, 4], strides = [1, 1, 1]} : vector<18x9x4xf32> to vector<16x9x4xf32>
    %85 = vector.shape_cast %84 : vector<16x9x4xf32> to vector<8x2x9x4xf32>
    %86 = vector.extract_strided_slice %85 {offsets = [0, 0, 0, 0], sizes = [8, 1, 9, 4], strides = [1, 1, 1, 1]} : vector<8x2x9x4xf32> to vector<8x1x9x4xf32>
    %87 = vector.shape_cast %86 : vector<8x1x9x4xf32> to vector<8x9x4xf32>
    %88 = vector.extract_strided_slice %3 {offsets = [1, 0, 0], sizes = [16, 9, 4], strides = [1, 1, 1]} : vector<18x9x4xf32> to vector<16x9x4xf32>
    %89 = vector.shape_cast %88 : vector<16x9x4xf32> to vector<8x2x9x4xf32>
    %90 = vector.extract_strided_slice %89 {offsets = [0, 0, 0, 0], sizes = [8, 1, 9, 4], strides = [1, 1, 1, 1]} : vector<8x2x9x4xf32> to vector<8x1x9x4xf32>
    %91 = vector.shape_cast %90 : vector<8x1x9x4xf32> to vector<8x9x4xf32>
    %92 = vector.extract_strided_slice %87 {offsets = [0, 0, 0], sizes = [8, 8, 4], strides = [1, 1, 1]} : vector<8x9x4xf32> to vector<8x8x4xf32>
    %93 = vector.shape_cast %92 : vector<8x8x4xf32> to vector<64x4xf32>
    %94 = vector.extract_strided_slice %91 {offsets = [0, 0, 0], sizes = [8, 8, 4], strides = [1, 1, 1]} : vector<8x9x4xf32> to vector<8x8x4xf32>
    %95 = vector.shape_cast %94 : vector<8x8x4xf32> to vector<64x4xf32>
    %c1_50 = arith.constant 1 : index
    %c0_51 = arith.constant 0 : index
    %c0_52 = arith.constant 0 : index
    %c0_53 = arith.constant 0 : index
    %96 = vector.load %arg7[%c1_50, %c0_51, %c0_52, %c0_53] : memref<3x3x4x8xf32, #tpu.memory_space<vmem>>, vector<1x1x4x8xf32>
    %97 = vector.shape_cast %96 : vector<1x1x4x8xf32> to vector<4x8xf32>
    %cst_54 = arith.constant dense<0.000000e+00> : vector<64x8xf32>
    %98 = tpu.matmul %93, %97, %cst_54 {dimension_numbers = #tpu.dot_dimension_numbers<[1], [0], [0], [1], [0, 0, 1, 1], [], []>} : vector<64x4xf32>, vector<4x8xf32>, vector<64x8xf32> -> vector<64x8xf32>
    %99 = arith.addf %79, %98 : vector<64x8xf32>
    %c1_55 = arith.constant 1 : index
    %c0_56 = arith.constant 0 : index
    %c0_57 = arith.constant 0 : index
    %c0_58 = arith.constant 0 : index
    %100 = vector.load %arg9[%c1_55, %c0_56, %c0_57, %c0_58] : memref<3x3x4x8xf32, #tpu.memory_space<vmem>>, vector<1x1x4x8xf32>
    %101 = vector.shape_cast %100 : vector<1x1x4x8xf32> to vector<4x8xf32>
    %cst_59 = arith.constant dense<0.000000e+00> : vector<64x8xf32>
    %102 = tpu.matmul %95, %101, %cst_59 {dimension_numbers = #tpu.dot_dimension_numbers<[1], [0], [0], [1], [0, 0, 1, 1], [], []>} : vector<64x4xf32>, vector<4x8xf32>, vector<64x8xf32> -> vector<64x8xf32>
    %103 = arith.addf %83, %102 : vector<64x8xf32>
    %104 = vector.extract_strided_slice %21 {offsets = [1, 0, 0], sizes = [16, 9, 4], strides = [1, 1, 1]} : vector<18x9x4xf32> to vector<16x9x4xf32>
    %105 = vector.shape_cast %104 : vector<16x9x4xf32> to vector<8x2x9x4xf32>
    %106 = vector.extract_strided_slice %105 {offsets = [0, 0, 0, 0], sizes = [8, 1, 9, 4], strides = [1, 1, 1, 1]} : vector<8x2x9x4xf32> to vector<8x1x9x4xf32>
    %107 = vector.shape_cast %106 : vector<8x1x9x4xf32> to vector<8x9x4xf32>
    %108 = vector.extract_strided_slice %13 {offsets = [1, 0, 0], sizes = [16, 9, 4], strides = [1, 1, 1]} : vector<18x9x4xf32> to vector<16x9x4xf32>
    %109 = vector.shape_cast %108 : vector<16x9x4xf32> to vector<8x2x9x4xf32>
    %110 = vector.extract_strided_slice %109 {offsets = [0, 0, 0, 0], sizes = [8, 1, 9, 4], strides = [1, 1, 1, 1]} : vector<8x2x9x4xf32> to vector<8x1x9x4xf32>
    %111 = vector.shape_cast %110 : vector<8x1x9x4xf32> to vector<8x9x4xf32>
    %112 = vector.extract_strided_slice %107 {offsets = [0, 0, 0], sizes = [8, 8, 4], strides = [1, 1, 1]} : vector<8x9x4xf32> to vector<8x8x4xf32>
    %113 = vector.shape_cast %112 : vector<8x8x4xf32> to vector<64x4xf32>
    %114 = vector.extract_strided_slice %111 {offsets = [0, 0, 0], sizes = [8, 8, 4], strides = [1, 1, 1]} : vector<8x9x4xf32> to vector<8x8x4xf32>
    %115 = vector.shape_cast %114 : vector<8x8x4xf32> to vector<64x4xf32>
    %c1_60 = arith.constant 1 : index
    %c1_61 = arith.constant 1 : index
    %c0_62 = arith.constant 0 : index
    %c0_63 = arith.constant 0 : index
    %116 = vector.load %arg7[%c1_60, %c1_61, %c0_62, %c0_63] : memref<3x3x4x8xf32, #tpu.memory_space<vmem>>, vector<1x1x4x8xf32>
    %117 = vector.shape_cast %116 : vector<1x1x4x8xf32> to vector<4x8xf32>
    %cst_64 = arith.constant dense<0.000000e+00> : vector<64x8xf32>
    %118 = tpu.matmul %113, %117, %cst_64 {dimension_numbers = #tpu.dot_dimension_numbers<[1], [0], [0], [1], [0, 0, 1, 1], [], []>} : vector<64x4xf32>, vector<4x8xf32>, vector<64x8xf32> -> vector<64x8xf32>
    %119 = arith.addf %99, %118 : vector<64x8xf32>
    %c1_65 = arith.constant 1 : index
    %c1_66 = arith.constant 1 : index
    %c0_67 = arith.constant 0 : index
    %c0_68 = arith.constant 0 : index
    %120 = vector.load %arg9[%c1_65, %c1_66, %c0_67, %c0_68] : memref<3x3x4x8xf32, #tpu.memory_space<vmem>>, vector<1x1x4x8xf32>
    %121 = vector.shape_cast %120 : vector<1x1x4x8xf32> to vector<4x8xf32>
    %cst_69 = arith.constant dense<0.000000e+00> : vector<64x8xf32>
    %122 = tpu.matmul %115, %121, %cst_69 {dimension_numbers = #tpu.dot_dimension_numbers<[1], [0], [0], [1], [0, 0, 1, 1], [], []>} : vector<64x4xf32>, vector<4x8xf32>, vector<64x8xf32> -> vector<64x8xf32>
    %123 = arith.addf %103, %122 : vector<64x8xf32>
    %124 = vector.extract_strided_slice %11 {offsets = [1, 0, 0], sizes = [16, 9, 4], strides = [1, 1, 1]} : vector<18x9x4xf32> to vector<16x9x4xf32>
    %125 = vector.shape_cast %124 : vector<16x9x4xf32> to vector<8x2x9x4xf32>
    %126 = vector.extract_strided_slice %125 {offsets = [0, 0, 0, 0], sizes = [8, 1, 9, 4], strides = [1, 1, 1, 1]} : vector<8x2x9x4xf32> to vector<8x1x9x4xf32>
    %127 = vector.shape_cast %126 : vector<8x1x9x4xf32> to vector<8x9x4xf32>
    %128 = vector.extract_strided_slice %3 {offsets = [1, 0, 0], sizes = [16, 9, 4], strides = [1, 1, 1]} : vector<18x9x4xf32> to vector<16x9x4xf32>
    %129 = vector.shape_cast %128 : vector<16x9x4xf32> to vector<8x2x9x4xf32>
    %130 = vector.extract_strided_slice %129 {offsets = [0, 0, 0, 0], sizes = [8, 1, 9, 4], strides = [1, 1, 1, 1]} : vector<8x2x9x4xf32> to vector<8x1x9x4xf32>
    %131 = vector.shape_cast %130 : vector<8x1x9x4xf32> to vector<8x9x4xf32>
    %132 = vector.extract_strided_slice %127 {offsets = [0, 1, 0], sizes = [8, 8, 4], strides = [1, 1, 1]} : vector<8x9x4xf32> to vector<8x8x4xf32>
    %133 = vector.shape_cast %132 : vector<8x8x4xf32> to vector<64x4xf32>
    %134 = vector.extract_strided_slice %131 {offsets = [0, 1, 0], sizes = [8, 8, 4], strides = [1, 1, 1]} : vector<8x9x4xf32> to vector<8x8x4xf32>
    %135 = vector.shape_cast %134 : vector<8x8x4xf32> to vector<64x4xf32>
    %c1_70 = arith.constant 1 : index
    %c2_71 = arith.constant 2 : index
    %c0_72 = arith.constant 0 : index
    %c0_73 = arith.constant 0 : index
    %136 = vector.load %arg7[%c1_70, %c2_71, %c0_72, %c0_73] : memref<3x3x4x8xf32, #tpu.memory_space<vmem>>, vector<1x1x4x8xf32>
    %137 = vector.shape_cast %136 : vector<1x1x4x8xf32> to vector<4x8xf32>
    %cst_74 = arith.constant dense<0.000000e+00> : vector<64x8xf32>
    %138 = tpu.matmul %133, %137, %cst_74 {dimension_numbers = #tpu.dot_dimension_numbers<[1], [0], [0], [1], [0, 0, 1, 1], [], []>} : vector<64x4xf32>, vector<4x8xf32>, vector<64x8xf32> -> vector<64x8xf32>
    %139 = arith.addf %119, %138 : vector<64x8xf32>
    %c1_75 = arith.constant 1 : index
    %c2_76 = arith.constant 2 : index
    %c0_77 = arith.constant 0 : index
    %c0_78 = arith.constant 0 : index
    %140 = vector.load %arg9[%c1_75, %c2_76, %c0_77, %c0_78] : memref<3x3x4x8xf32, #tpu.memory_space<vmem>>, vector<1x1x4x8xf32>
    %141 = vector.shape_cast %140 : vector<1x1x4x8xf32> to vector<4x8xf32>
    %cst_79 = arith.constant dense<0.000000e+00> : vector<64x8xf32>
    %142 = tpu.matmul %135, %141, %cst_79 {dimension_numbers = #tpu.dot_dimension_numbers<[1], [0], [0], [1], [0, 0, 1, 1], [], []>} : vector<64x4xf32>, vector<4x8xf32>, vector<64x8xf32> -> vector<64x8xf32>
    %143 = arith.addf %123, %142 : vector<64x8xf32>
    %144 = vector.extract_strided_slice %11 {offsets = [2, 0, 0], sizes = [16, 9, 4], strides = [1, 1, 1]} : vector<18x9x4xf32> to vector<16x9x4xf32>
    %145 = vector.shape_cast %144 : vector<16x9x4xf32> to vector<8x2x9x4xf32>
    %146 = vector.extract_strided_slice %145 {offsets = [0, 0, 0, 0], sizes = [8, 1, 9, 4], strides = [1, 1, 1, 1]} : vector<8x2x9x4xf32> to vector<8x1x9x4xf32>
    %147 = vector.shape_cast %146 : vector<8x1x9x4xf32> to vector<8x9x4xf32>
    %148 = vector.extract_strided_slice %3 {offsets = [2, 0, 0], sizes = [16, 9, 4], strides = [1, 1, 1]} : vector<18x9x4xf32> to vector<16x9x4xf32>
    %149 = vector.shape_cast %148 : vector<16x9x4xf32> to vector<8x2x9x4xf32>
    %150 = vector.extract_strided_slice %149 {offsets = [0, 0, 0, 0], sizes = [8, 1, 9, 4], strides = [1, 1, 1, 1]} : vector<8x2x9x4xf32> to vector<8x1x9x4xf32>
    %151 = vector.shape_cast %150 : vector<8x1x9x4xf32> to vector<8x9x4xf32>
    %152 = vector.extract_strided_slice %147 {offsets = [0, 0, 0], sizes = [8, 8, 4], strides = [1, 1, 1]} : vector<8x9x4xf32> to vector<8x8x4xf32>
    %153 = vector.shape_cast %152 : vector<8x8x4xf32> to vector<64x4xf32>
    %154 = vector.extract_strided_slice %151 {offsets = [0, 0, 0], sizes = [8, 8, 4], strides = [1, 1, 1]} : vector<8x9x4xf32> to vector<8x8x4xf32>
    %155 = vector.shape_cast %154 : vector<8x8x4xf32> to vector<64x4xf32>
    %c2_80 = arith.constant 2 : index
    %c0_81 = arith.constant 0 : index
    %c0_82 = arith.constant 0 : index
    %c0_83 = arith.constant 0 : index
    %156 = vector.load %arg7[%c2_80, %c0_81, %c0_82, %c0_83] : memref<3x3x4x8xf32, #tpu.memory_space<vmem>>, vector<1x1x4x8xf32>
    %157 = vector.shape_cast %156 : vector<1x1x4x8xf32> to vector<4x8xf32>
    %cst_84 = arith.constant dense<0.000000e+00> : vector<64x8xf32>
    %158 = tpu.matmul %153, %157, %cst_84 {dimension_numbers = #tpu.dot_dimension_numbers<[1], [0], [0], [1], [0, 0, 1, 1], [], []>} : vector<64x4xf32>, vector<4x8xf32>, vector<64x8xf32> -> vector<64x8xf32>
    %159 = arith.addf %139, %158 : vector<64x8xf32>
    %c2_85 = arith.constant 2 : index
    %c0_86 = arith.constant 0 : index
    %c0_87 = arith.constant 0 : index
    %c0_88 = arith.constant 0 : index
    %160 = vector.load %arg9[%c2_85, %c0_86, %c0_87, %c0_88] : memref<3x3x4x8xf32, #tpu.memory_space<vmem>>, vector<1x1x4x8xf32>
    %161 = vector.shape_cast %160 : vector<1x1x4x8xf32> to vector<4x8xf32>
    %cst_89 = arith.constant dense<0.000000e+00> : vector<64x8xf32>
    %162 = tpu.matmul %155, %161, %cst_89 {dimension_numbers = #tpu.dot_dimension_numbers<[1], [0], [0], [1], [0, 0, 1, 1], [], []>} : vector<64x4xf32>, vector<4x8xf32>, vector<64x8xf32> -> vector<64x8xf32>
    %163 = arith.addf %143, %162 : vector<64x8xf32>
    %164 = vector.extract_strided_slice %21 {offsets = [2, 0, 0], sizes = [16, 9, 4], strides = [1, 1, 1]} : vector<18x9x4xf32> to vector<16x9x4xf32>
    %165 = vector.shape_cast %164 : vector<16x9x4xf32> to vector<8x2x9x4xf32>
    %166 = vector.extract_strided_slice %165 {offsets = [0, 0, 0, 0], sizes = [8, 1, 9, 4], strides = [1, 1, 1, 1]} : vector<8x2x9x4xf32> to vector<8x1x9x4xf32>
    %167 = vector.shape_cast %166 : vector<8x1x9x4xf32> to vector<8x9x4xf32>
    %168 = vector.extract_strided_slice %13 {offsets = [2, 0, 0], sizes = [16, 9, 4], strides = [1, 1, 1]} : vector<18x9x4xf32> to vector<16x9x4xf32>
    %169 = vector.shape_cast %168 : vector<16x9x4xf32> to vector<8x2x9x4xf32>
    %170 = vector.extract_strided_slice %169 {offsets = [0, 0, 0, 0], sizes = [8, 1, 9, 4], strides = [1, 1, 1, 1]} : vector<8x2x9x4xf32> to vector<8x1x9x4xf32>
    %171 = vector.shape_cast %170 : vector<8x1x9x4xf32> to vector<8x9x4xf32>
    %172 = vector.extract_strided_slice %167 {offsets = [0, 0, 0], sizes = [8, 8, 4], strides = [1, 1, 1]} : vector<8x9x4xf32> to vector<8x8x4xf32>
    %173 = vector.shape_cast %172 : vector<8x8x4xf32> to vector<64x4xf32>
    %174 = vector.extract_strided_slice %171 {offsets = [0, 0, 0], sizes = [8, 8, 4], strides = [1, 1, 1]} : vector<8x9x4xf32> to vector<8x8x4xf32>
    %175 = vector.shape_cast %174 : vector<8x8x4xf32> to vector<64x4xf32>
    %c2_90 = arith.constant 2 : index
    %c1_91 = arith.constant 1 : index
    %c0_92 = arith.constant 0 : index
    %c0_93 = arith.constant 0 : index
    %176 = vector.load %arg7[%c2_90, %c1_91, %c0_92, %c0_93] : memref<3x3x4x8xf32, #tpu.memory_space<vmem>>, vector<1x1x4x8xf32>
    %177 = vector.shape_cast %176 : vector<1x1x4x8xf32> to vector<4x8xf32>
    %cst_94 = arith.constant dense<0.000000e+00> : vector<64x8xf32>
    %178 = tpu.matmul %173, %177, %cst_94 {dimension_numbers = #tpu.dot_dimension_numbers<[1], [0], [0], [1], [0, 0, 1, 1], [], []>} : vector<64x4xf32>, vector<4x8xf32>, vector<64x8xf32> -> vector<64x8xf32>
    %179 = arith.addf %159, %178 : vector<64x8xf32>
    %c2_95 = arith.constant 2 : index
    %c1_96 = arith.constant 1 : index
    %c0_97 = arith.constant 0 : index
    %c0_98 = arith.constant 0 : index
    %180 = vector.load %arg9[%c2_95, %c1_96, %c0_97, %c0_98] : memref<3x3x4x8xf32, #tpu.memory_space<vmem>>, vector<1x1x4x8xf32>
    %181 = vector.shape_cast %180 : vector<1x1x4x8xf32> to vector<4x8xf32>
    %cst_99 = arith.constant dense<0.000000e+00> : vector<64x8xf32>
    %182 = tpu.matmul %175, %181, %cst_99 {dimension_numbers = #tpu.dot_dimension_numbers<[1], [0], [0], [1], [0, 0, 1, 1], [], []>} : vector<64x4xf32>, vector<4x8xf32>, vector<64x8xf32> -> vector<64x8xf32>
    %183 = arith.addf %163, %182 : vector<64x8xf32>
    %184 = vector.extract_strided_slice %11 {offsets = [2, 0, 0], sizes = [16, 9, 4], strides = [1, 1, 1]} : vector<18x9x4xf32> to vector<16x9x4xf32>
    %185 = vector.shape_cast %184 : vector<16x9x4xf32> to vector<8x2x9x4xf32>
    %186 = vector.extract_strided_slice %185 {offsets = [0, 0, 0, 0], sizes = [8, 1, 9, 4], strides = [1, 1, 1, 1]} : vector<8x2x9x4xf32> to vector<8x1x9x4xf32>
    %187 = vector.shape_cast %186 : vector<8x1x9x4xf32> to vector<8x9x4xf32>
    %188 = vector.extract_strided_slice %3 {offsets = [2, 0, 0], sizes = [16, 9, 4], strides = [1, 1, 1]} : vector<18x9x4xf32> to vector<16x9x4xf32>
    %189 = vector.shape_cast %188 : vector<16x9x4xf32> to vector<8x2x9x4xf32>
    %190 = vector.extract_strided_slice %189 {offsets = [0, 0, 0, 0], sizes = [8, 1, 9, 4], strides = [1, 1, 1, 1]} : vector<8x2x9x4xf32> to vector<8x1x9x4xf32>
    %191 = vector.shape_cast %190 : vector<8x1x9x4xf32> to vector<8x9x4xf32>
    %192 = vector.extract_strided_slice %187 {offsets = [0, 1, 0], sizes = [8, 8, 4], strides = [1, 1, 1]} : vector<8x9x4xf32> to vector<8x8x4xf32>
    %193 = vector.shape_cast %192 : vector<8x8x4xf32> to vector<64x4xf32>
    %194 = vector.extract_strided_slice %191 {offsets = [0, 1, 0], sizes = [8, 8, 4], strides = [1, 1, 1]} : vector<8x9x4xf32> to vector<8x8x4xf32>
    %195 = vector.shape_cast %194 : vector<8x8x4xf32> to vector<64x4xf32>
    %c2_100 = arith.constant 2 : index
    %c2_101 = arith.constant 2 : index
    %c0_102 = arith.constant 0 : index
    %c0_103 = arith.constant 0 : index
    %196 = vector.load %arg7[%c2_100, %c2_101, %c0_102, %c0_103] : memref<3x3x4x8xf32, #tpu.memory_space<vmem>>, vector<1x1x4x8xf32>
    %197 = vector.shape_cast %196 : vector<1x1x4x8xf32> to vector<4x8xf32>
    %cst_104 = arith.constant dense<0.000000e+00> : vector<64x8xf32>
    %198 = tpu.matmul %193, %197, %cst_104 {dimension_numbers = #tpu.dot_dimension_numbers<[1], [0], [0], [1], [0, 0, 1, 1], [], []>} : vector<64x4xf32>, vector<4x8xf32>, vector<64x8xf32> -> vector<64x8xf32>
    %199 = arith.addf %179, %198 : vector<64x8xf32>
    %c2_105 = arith.constant 2 : index
    %c2_106 = arith.constant 2 : index
    %c0_107 = arith.constant 0 : index
    %c0_108 = arith.constant 0 : index
    %200 = vector.load %arg9[%c2_105, %c2_106, %c0_107, %c0_108] : memref<3x3x4x8xf32, #tpu.memory_space<vmem>>, vector<1x1x4x8xf32>
    %201 = vector.shape_cast %200 : vector<1x1x4x8xf32> to vector<4x8xf32>
    %cst_109 = arith.constant dense<0.000000e+00> : vector<64x8xf32>
    %202 = tpu.matmul %195, %201, %cst_109 {dimension_numbers = #tpu.dot_dimension_numbers<[1], [0], [0], [1], [0, 0, 1, 1], [], []>} : vector<64x4xf32>, vector<4x8xf32>, vector<64x8xf32> -> vector<64x8xf32>
    %203 = arith.addf %183, %202 : vector<64x8xf32>
    %c0_110 = arith.constant 0 : index
    %c0_111 = arith.constant 0 : index
    %204 = vector.load %arg8[%c0_110, %c0_111] : memref<1x8xf32, #tpu.memory_space<vmem>>, vector<1x8xf32>
    %205 = vector.broadcast %204 : vector<1x8xf32> to vector<64x8xf32>
    %206 = arith.addf %199, %205 : vector<64x8xf32>
    %207 = vector.shape_cast %206 : vector<64x8xf32> to vector<8x8x8xf32>
    %c0_112 = arith.constant 0 : index
    %c0_113 = arith.constant 0 : index
    %c0_114 = arith.constant 0 : index
    %c0_115 = arith.constant 0 : index
    %208 = vector.load %arg11[%c0_112, %c0_113, %c0_114, %c0_115] : memref<1x8x8x8xf32, #tpu.memory_space<vmem>>, vector<1x8x8x8xf32>
    %209 = vector.shape_cast %208 : vector<1x8x8x8xf32> to vector<8x8x8xf32>
    %210 = vector.shape_cast %207 : vector<8x8x8xf32> to vector<1x8x8x8xf32>
    tpu.vector_store %arg11[%c0_112, %c0_113, %c0_114, %c0_115], %210 {strides = array<i32>} : memref<1x8x8x8xf32, #tpu.memory_space<vmem>>, vector<1x8x8x8xf32>,
    %c0_116 = arith.constant 0 : index
    %c0_117 = arith.constant 0 : index
    %211 = vector.load %arg10[%c0_116, %c0_117] : memref<1x8xf32, #tpu.memory_space<vmem>>, vector<1x8xf32>
    %212 = vector.broadcast %211 : vector<1x8xf32> to vector<64x8xf32>
    %213 = arith.addf %203, %212 : vector<64x8xf32>
    %214 = vector.shape_cast %213 : vector<64x8xf32> to vector<8x8x8xf32>
    %c0_118 = arith.constant 0 : index
    %c0_119 = arith.constant 0 : index
    %c0_120 = arith.constant 0 : index
    %c0_121 = arith.constant 0 : index
    %215 = vector.load %arg12[%c0_118, %c0_119, %c0_120, %c0_121] : memref<1x8x8x8xf32, #tpu.memory_space<vmem>>, vector<1x8x8x8xf32>
    %216 = vector.shape_cast %215 : vector<1x8x8x8xf32> to vector<8x8x8xf32>
    %217 = vector.shape_cast %214 : vector<8x8x8xf32> to vector<1x8x8x8xf32>
    tpu.vector_store %arg12[%c0_118, %c0_119, %c0_120, %c0_121], %217 {strides = array<i32>} : memref<1x8x8x8xf32, #tpu.memory_space<vmem>>, vector<1x8x8x8xf32>,
    return
  }
  func.func @transform_0(%arg0: i32) -> (i32, i32, i32, i32) {
    %c0_i32 = arith.constant 0 : i32
    %c0_i32_0 = arith.constant 0 : i32
    %c0_i32_1 = arith.constant 0 : i32
    %c0_i32_2 = arith.constant 0 : i32
    return %arg0, %c0_i32, %c0_i32_0, %c0_i32_1 : i32, i32, i32, i32
  }
  func.func @transform_1(%arg0: i32) -> (i32, i32, i32, i32) {
    %c0_i32 = arith.constant 0 : i32
    %c0_i32_0 = arith.constant 0 : i32
    %c0_i32_1 = arith.constant 0 : i32
    %c0_i32_2 = arith.constant 0 : i32
    return %arg0, %c0_i32, %c0_i32_0, %c0_i32_1 : i32, i32, i32, i32
  }
  func.func @transform_2(%arg0: i32) -> (i32, i32, i32) {
    %c0_i32 = arith.constant 0 : i32
    %c0_i32_0 = arith.constant 0 : i32
    %c0_i32_1 = arith.constant 0 : i32
    %c0_i32_2 = arith.constant 0 : i32
    return %c0_i32, %c0_i32_0, %c0_i32_1 : i32, i32, i32
  }
  func.func @transform_3(%arg0: i32) -> (i32, i32, i32) {
    %c0_i32 = arith.constant 0 : i32
    %c0_i32_0 = arith.constant 0 : i32
    %c0_i32_1 = arith.constant 0 : i32
    %c0_i32_2 = arith.constant 0 : i32
    return %c0_i32, %c0_i32_0, %c0_i32_1 : i32, i32, i32
  }
  func.func @transform_4(%arg0: i32) -> (i32, i32, i32) {
    %c0_i32 = arith.constant 0 : i32
    %c0_i32_0 = arith.constant 0 : i32
    %c0_i32_1 = arith.constant 0 : i32
    %c0_i32_2 = arith.constant 0 : i32
    return %c0_i32, %c0_i32_0, %c0_i32_1 : i32, i32, i32
  }
  func.func @transform_5(%arg0: i32) -> (i32, i32, i32) {
    %c0_i32 = arith.constant 0 : i32
    %c0_i32_0 = arith.constant 0 : i32
    %c0_i32_1 = arith.constant 0 : i32
    %c0_i32_2 = arith.constant 0 : i32
    return %c0_i32, %c0_i32_0, %c0_i32_1 : i32, i32, i32
  }
  func.func @transform_6(%arg0: i32) -> (i32, i32, i32, i32) {
    %c0_i32 = arith.constant 0 : i32
    %c0_i32_0 = arith.constant 0 : i32
    %c0_i32_1 = arith.constant 0 : i32
    %c0_i32_2 = arith.constant 0 : i32
    %c0_i32_3 = arith.constant 0 : i32
    return %c0_i32, %c0_i32_0, %c0_i32_1, %c0_i32_2 : i32, i32, i32, i32
  }
  func.func @transform_7(%arg0: i32) -> (i32, i32) {
    %c0_i32 = arith.constant 0 : i32
    %c0_i32_0 = arith.constant 0 : i32
    %c0_i32_1 = arith.constant 0 : i32
    return %c0_i32, %c0_i32_0 : i32, i32
  }
  func.func @transform_8(%arg0: i32) -> (i32, i32, i32, i32) {
    %c0_i32 = arith.constant 0 : i32
    %c0_i32_0 = arith.constant 0 : i32
    %c0_i32_1 = arith.constant 0 : i32
    %c0_i32_2 = arith.constant 0 : i32
    %c0_i32_3 = arith.constant 0 : i32
    return %c0_i32, %c0_i32_0, %c0_i32_1, %c0_i32_2 : i32, i32, i32, i32
  }
  func.func @transform_9(%arg0: i32) -> (i32, i32) {
    %c0_i32 = arith.constant 0 : i32
    %c0_i32_0 = arith.constant 0 : i32
    %c0_i32_1 = arith.constant 0 : i32
    return %c0_i32, %c0_i32_0 : i32, i32
  }
  func.func @transform_10(%arg0: i32) -> (i32, i32, i32, i32) {
    %c0_i32 = arith.constant 0 : i32
    %c0_i32_0 = arith.constant 0 : i32
    %c0_i32_1 = arith.constant 0 : i32
    %c0_i32_2 = arith.constant 0 : i32
    return %arg0, %c0_i32, %c0_i32_0, %c0_i32_1 : i32, i32, i32, i32
  }
  func.func @transform_11(%arg0: i32) -> (i32, i32, i32, i32) {
    %c0_i32 = arith.constant 0 : i32
    %c0_i32_0 = arith.constant 0 : i32
    %c0_i32_1 = arith.constant 0 : i32
    %c0_i32_2 = arith.constant 0 : i32
    return %arg0, %c0_i32, %c0_i32_0, %c0_i32_1 : i32, i32, i32, i32
  }
}

</mosaic_0001>

<llo_original>
// kernel: tpu_custom_call.1
$region0: #{tpu_custom_call.1}
  #allocation0 [shape = 'u32[]', space=smem, size = 0x4, offset = 0x4, fixed_abs, tag = 'smem constant byte address 0x4 - core index']
  #allocation1 [shape = 'u32[72,128]{1,0:T(1,128)}', space=vmem, size = 0x9000, scoped, tag = 'internal scratch']
  %s0 = inlined_call_operand.vmem [shape: f32[2,18,9,4], index: 0, kind: input, shape index: {}]
  %s1 = inlined_call_operand.vmem [shape: f32[2,18,9,4], index: 1, kind: input, shape index: {}]
  %s2 = inlined_call_operand.vmem [shape: f32[18,9,4], index: 2, kind: input, shape index: {}]
  %s3 = inlined_call_operand.vmem [shape: f32[18,9,4], index: 3, kind: input, shape index: {}]
  %s4 = inlined_call_operand.vmem [shape: f32[1,1,4], index: 4, kind: input, shape index: {}]
  %s5 = inlined_call_operand.vmem [shape: f32[1,1,4], index: 5, kind: input, shape index: {}]
  %s6 = inlined_call_operand.vmem [shape: f32[3,3,4,8], index: 6, kind: input, shape index: {}]
  %s7 = inlined_call_operand.vmem [shape: f32[1,8], index: 7, kind: input, shape index: {}]
  %s8 = inlined_call_operand.vmem [shape: f32[3,3,4,8], index: 8, kind: input, shape index: {}]
  %s9 = inlined_call_operand.vmem [shape: f32[1,8], index: 9, kind: input, shape index: {}]
  %s10 = inlined_call_operand.hbm [shape: f32[2,8,8,8], index: 10, kind: output, shape index: {0}]
  %s11 = inlined_call_operand.hbm [shape: f32[2,8,8,8], index: 11, kind: output, shape index: {1}]
  %12 = xla_tuple %s10, %s11
  %s13 = sld [smem:[#allocation0]]
  $region81: #{tpu_custom_call.1} parent=0
    _
  %s15 = ssub.s32 1, %s13
  %s16 = scalar_select 0, %s15, %s13
  $region1: #{tpu_custom_call.1} parent=0
    #allocation2 [shape = 'u8[65536]{0}', space=vmem, size = 0x10000, scoped, tag = 'output window, operand 0']
    #allocation3 [shape = 's32[2]{0}', space=sflag, size = 0x8, scoped, tag = 'scoped memory for tpu_custom_call.1']
    #allocation4 [shape = 'u8[65536]{0}', space=vmem, size = 0x10000, scoped, tag = 'output window, operand 1']
    #allocation5 [shape = 's32[2]{0}', space=sflag, size = 0x8, scoped, tag = 'scoped memory for tpu_custom_call.1']
    %17 = vsyncpa [#allocation3], 0
    %s18 = scalar_lea.sflag [#allocation3], 1
    %19 = vsyncpa %s18, 0
    %20 = vsyncpa [#allocation5], 0
    %s21 = scalar_lea.sflag [#allocation5], 1
    %22 = vsyncpa %s21, 0
    loop: start=0, step=1, limit=4
    $region2: #{tpu_custom_call.1} parent=1 // loop_pre_header
      _
    $region3: #{tpu_custom_call.1} parent=1 // loop_header
      %s24 = sphi 0, %s28
      %p25 = scmp.ge.s32.totalorder %s24, 4
      %s34 = sphi 0, %s36
      %s37 = sphi 0, %s34
      %s38 = sphi 0, %s37
      %s54 = sphi 0, %s38
      %s60 = sphi 0, %s62
      %s63 = sphi 0, %s60
      %s64 = sphi 0, %s63
      %s80 = sphi 0, %s64
      %s84 = sphi 0, %s84
      %s86 = sphi 0, %s84
      %s87 = sphi 0, %s86
      %s101 = sphi 0, %s87
      %s105 = sphi 0, %s105
      %s107 = sphi 0, %s105
      %s108 = sphi 0, %s107
      %s122 = sphi 0, %s108
      %s126 = sphi 0, %s126
      %s128 = sphi 0, %s126
      %s129 = sphi 0, %s128
      %s143 = sphi 0, %s129
      %s147 = sphi 0, %s147
      %s149 = sphi 0, %s147
      %s150 = sphi 0, %s149
      %s164 = sphi 0, %s150
      %s168 = sphi 0, %s168
      %s170 = sphi 0, %s168
      %s171 = sphi 0, %s170
      %s185 = sphi 0, %s171
      %s189 = sphi 0, %s189
      %s191 = sphi 0, %s189
      %s192 = sphi 0, %s191
      %s206 = sphi 0, %s192
      %s210 = sphi 0, %s210
      %s212 = sphi 0, %s210
      %s213 = sphi 0, %s212
      %s227 = sphi 0, %s213
      %s231 = sphi 0, %s231
      %s233 = sphi 0, %s231
      %s234 = sphi 0, %s233
      %s248 = sphi 0, %s234
      %s254 = sphi 0, %s256
      %s257 = sphi 0, %s254
      %s258 = sphi 0, %s257
      %s274 = sphi 0, %s258
      %s280 = sphi 0, %s282
      %s283 = sphi 0, %s280
      %s284 = sphi 0, %s283
      %s300 = sphi 0, %s284
    $region4: #{tpu_custom_call.1} parent=1 // loop_header_branch
      %27 = sbr.rel (%p25) target = $region8
    $region5: #{tpu_custom_call.1} parent=1 // loop_body
      %s29 = ssub.s32 %s24, 1
      %s30 = ssub.s32 %s24, 2
      %s31 = sadd.s32 %s24, 1
      %s32 = ssub.s32 %s24, %s31
      %p33 = scmp.eq.s32.totalorder %s32, 0
      %s35 = sadd.s32 %s34, 1
      %s36 = scalar_select %p33, %s34, %s35
      %p39 = pneg %p33
      %p40 = scmp.eq.s32.totalorder %s24, 1
      %p41 = por %p39, %p40
      %p42 = scmp.ne.s32.totalorder %s34, %s37
      %p43 = scmp.eq.s32.totalorder %s24, 0
      %p44 = por %p42, %p43
      %p45 = scmp.ne.s32.totalorder %s34, %s37
      %p46 = scmp.eq.s32.totalorder %s29, 1
      %p47 = por %p45, %p46
      %p48 = scmp.ne.s32.totalorder %s37, %s38
      %p49 = scmp.eq.s32.totalorder %s29, 0
      %p50 = por %p48, %p49
      %p51 = scmp.ne.s32.totalorder %s37, %s38
      %p52 = scmp.eq.s32.totalorder %s30, 1
      %p53 = por %p51, %p52
      %p55 = scmp.ne.s32.totalorder %s38, %s54
      %p56 = scmp.eq.s32.totalorder %s30, 0
      %p57 = por %p55, %p56
      %s58 = ssub.s32 %s24, %s31
      %p59 = scmp.eq.s32.totalorder %s58, 0
      %s61 = sadd.s32 %s60, 1
      %s62 = scalar_select %p59, %s60, %s61
      %p65 = pneg %p59
      %p66 = scmp.eq.s32.totalorder %s24, 1
      %p67 = por %p65, %p66
      %p68 = scmp.ne.s32.totalorder %s60, %s63
      %p69 = scmp.eq.s32.totalorder %s24, 0
      %p70 = por %p68, %p69
      %p71 = scmp.ne.s32.totalorder %s60, %s63
      %p72 = scmp.eq.s32.totalorder %s29, 1
      %p73 = por %p71, %p72
      %p74 = scmp.ne.s32.totalorder %s63, %s64
      %p75 = scmp.eq.s32.totalorder %s29, 0
      %p76 = por %p74, %p75
      %p77 = scmp.ne.s32.totalorder %s63, %s64
      %p78 = scmp.eq.s32.totalorder %s30, 1
      %p79 = por %p77, %p78
      %p81 = scmp.ne.s32.totalorder %s64, %s80
      %p82 = scmp.eq.s32.totalorder %s30, 0
      %p83 = por %p81, %p82
      %s85 = sadd.s32 %s84, 1
      %p88 = scmp.eq.s32.totalorder %s24, 1
      %p89 = scmp.ne.s32.totalorder %s84, %s86
      %p90 = scmp.eq.s32.totalorder %s24, 0
      %p91 = por %p89, %p90
      %p92 = scmp.ne.s32.totalorder %s84, %s86
      %p93 = scmp.eq.s32.totalorder %s29, 1
      %p94 = por %p92, %p93
      %p95 = scmp.ne.s32.totalorder %s86, %s87
      %p96 = scmp.eq.s32.totalorder %s29, 0
      %p97 = por %p95, %p96
      %p98 = scmp.ne.s32.totalorder %s86, %s87
      %p99 = scmp.eq.s32.totalorder %s30, 1
      %p100 = por %p98, %p99
      %p102 = scmp.ne.s32.totalorder %s87, %s101
      %p103 = scmp.eq.s32.totalorder %s30, 0
      %p104 = por %p102, %p103
      %s106 = sadd.s32 %s105, 1
      %p109 = scmp.eq.s32.totalorder %s24, 1
      %p110 = scmp.ne.s32.totalorder %s105, %s107
      %p111 = scmp.eq.s32.totalorder %s24, 0
      %p112 = por %p110, %p111
      %p113 = scmp.ne.s32.totalorder %s105, %s107
      %p114 = scmp.eq.s32.totalorder %s29, 1
      %p115 = por %p113, %p114
      %p116 = scmp.ne.s32.totalorder %s107, %s108
      %p117 = scmp.eq.s32.totalorder %s29, 0
      %p118 = por %p116, %p117
      %p119 = scmp.ne.s32.totalorder %s107, %s108
      %p120 = scmp.eq.s32.totalorder %s30, 1
      %p121 = por %p119, %p120
      %p123 = scmp.ne.s32.totalorder %s108, %s122
      %p124 = scmp.eq.s32.totalorder %s30, 0
      %p125 = por %p123, %p124
      %s127 = sadd.s32 %s126, 1
      %p130 = scmp.eq.s32.totalorder %s24, 1
      %p131 = scmp.ne.s32.totalorder %s126, %s128
      %p132 = scmp.eq.s32.totalorder %s24, 0
      %p133 = por %p131, %p132
      %p134 = scmp.ne.s32.totalorder %s126, %s128
      %p135 = scmp.eq.s32.totalorder %s29, 1
      %p136 = por %p134, %p135
      %p137 = scmp.ne.s32.totalorder %s128, %s129
      %p138 = scmp.eq.s32.totalorder %s29, 0
      %p139 = por %p137, %p138
      %p140 = scmp.ne.s32.totalorder %s128, %s129
      %p141 = scmp.eq.s32.totalorder %s30, 1
      %p142 = por %p140, %p141
      %p144 = scmp.ne.s32.totalorder %s129, %s143
      %p145 = scmp.eq.s32.totalorder %s30, 0
      %p146 = por %p144, %p145
      %s148 = sadd.s32 %s147, 1
      %p151 = scmp.eq.s32.totalorder %s24, 1
      %p152 = scmp.ne.s32.totalorder %s147, %s149
      %p153 = scmp.eq.s32.totalorder %s24, 0
      %p154 = por %p152, %p153
      %p155 = scmp.ne.s32.totalorder %s147, %s149
      %p156 = scmp.eq.s32.totalorder %s29, 1
      %p157 = por %p155, %p156
      %p158 = scmp.ne.s32.totalorder %s149, %s150
      %p159 = scmp.eq.s32.totalorder %s29, 0
      %p160 = por %p158, %p159
      %p161 = scmp.ne.s32.totalorder %s149, %s150
      %p162 = scmp.eq.s32.totalorder %s30, 1
      %p163 = por %p161, %p162
      %p165 = scmp.ne.s32.totalorder %s150, %s164
      %p166 = scmp.eq.s32.totalorder %s30, 0
      %p167 = por %p165, %p166
      %s169 = sadd.s32 %s168, 1
      %p172 = scmp.eq.s32.totalorder %s24, 1
      %p173 = scmp.ne.s32.totalorder %s168, %s170
      %p174 = scmp.eq.s32.totalorder %s24, 0
      %p175 = por %p173, %p174
      %p176 = scmp.ne.s32.totalorder %s168, %s170
      %p177 = scmp.eq.s32.totalorder %s29, 1
      %p178 = por %p176, %p177
      %p179 = scmp.ne.s32.totalorder %s170, %s171
      %p180 = scmp.eq.s32.totalorder %s29, 0
      %p181 = por %p179, %p180
      %p182 = scmp.ne.s32.totalorder %s170, %s171
      %p183 = scmp.eq.s32.totalorder %s30, 1
      %p184 = por %p182, %p183
      %p186 = scmp.ne.s32.totalorder %s171, %s185
      %p187 = scmp.eq.s32.totalorder %s30, 0
      %p188 = por %p186, %p187
      %s190 = sadd.s32 %s189, 1
      %p193 = scmp.eq.s32.totalorder %s24, 1
      %p194 = scmp.ne.s32.totalorder %s189, %s191
      %p195 = scmp.eq.s32.totalorder %s24, 0
      %p196 = por %p194, %p195
      %p197 = scmp.ne.s32.totalorder %s189, %s191
      %p198 = scmp.eq.s32.totalorder %s29, 1
      %p199 = por %p197, %p198
      %p200 = scmp.ne.s32.totalorder %s191, %s192
      %p201 = scmp.eq.s32.totalorder %s29, 0
      %p202 = por %p200, %p201
      %p203 = scmp.ne.s32.totalorder %s191, %s192
      %p204 = scmp.eq.s32.totalorder %s30, 1
      %p205 = por %p203, %p204
      %p207 = scmp.ne.s32.totalorder %s192, %s206
      %p208 = scmp.eq.s32.totalorder %s30, 0
      %p209 = por %p207, %p208
      %s211 = sadd.s32 %s210, 1
      %p214 = scmp.eq.s32.totalorder %s24, 1
      %p215 = scmp.ne.s32.totalorder %s210, %s212
      %p216 = scmp.eq.s32.totalorder %s24, 0
      %p217 = por %p215, %p216
      %p218 = scmp.ne.s32.totalorder %s210, %s212
      %p219 = scmp.eq.s32.totalorder %s29, 1
      %p220 = por %p218, %p219
      %p221 = scmp.ne.s32.totalorder %s212, %s213
      %p222 = scmp.eq.s32.totalorder %s29, 0
      %p223 = por %p221, %p222
      %p224 = scmp.ne.s32.totalorder %s212, %s213
      %p225 = scmp.eq.s32.totalorder %s30, 1
      %p226 = por %p224, %p225
      %p228 = scmp.ne.s32.totalorder %s213, %s227
      %p229 = scmp.eq.s32.totalorder %s30, 0
      %p230 = por %p228, %p229
      %s232 = sadd.s32 %s231, 1
      %p235 = scmp.eq.s32.totalorder %s24, 1
      %p236 = scmp.ne.s32.totalorder %s231, %s233
      %p237 = scmp.eq.s32.totalorder %s24, 0
      %p238 = por %p236, %p237
      %p239 = scmp.ne.s32.totalorder %s231, %s233
      %p240 = scmp.eq.s32.totalorder %s29, 1
      %p241 = por %p239, %p240
      %p242 = scmp.ne.s32.totalorder %s233, %s234
      %p243 = scmp.eq.s32.totalorder %s29, 0
      %p244 = por %p242, %p243
      %p245 = scmp.ne.s32.totalorder %s233, %s234
      %p246 = scmp.eq.s32.totalorder %s30, 1
      %p247 = por %p245, %p246
      %p249 = scmp.ne.s32.totalorder %s234, %s248
      %p250 = scmp.eq.s32.totalorder %s30, 0
      %p251 = por %p249, %p250
      %s252 = ssub.s32 %s24, %s31
      %p253 = scmp.eq.s32.totalorder %s252, 0
      %s255 = sadd.s32 %s254, 1
      %s256 = scalar_select %p253, %s254, %s255
      %p259 = pneg %p253
      %p260 = scmp.eq.s32.totalorder %s24, 1
      %p261 = por %p259, %p260
      %p262 = scmp.ne.s32.totalorder %s254, %s257
      %p263 = scmp.eq.s32.totalorder %s24, 0
      %p264 = por %p262, %p263
      %p265 = scmp.ne.s32.totalorder %s254, %s257
      %p266 = scmp.eq.s32.totalorder %s29, 1
      %p267 = por %p265, %p266
      %p268 = scmp.ne.s32.totalorder %s257, %s258
      %p269 = scmp.eq.s32.totalorder %s29, 0
      %p270 = por %p268, %p269
      %p271 = scmp.ne.s32.totalorder %s257, %s258
      %p272 = scmp.eq.s32.totalorder %s30, 1
      %p273 = por %p271, %p272
      %p275 = scmp.ne.s32.totalorder %s258, %s274
      %p276 = scmp.eq.s32.totalorder %s30, 0
      %p277 = por %p275, %p276
      %s278 = ssub.s32 %s24, %s31
      %p279 = scmp.eq.s32.totalorder %s278, 0
      %s281 = sadd.s32 %s280, 1
      %s282 = scalar_select %p279, %s280, %s281
      %p285 = pneg %p279
      %p286 = scmp.eq.s32.totalorder %s24, 1
      %p287 = por %p285, %p286
      %p288 = scmp.ne.s32.totalorder %s280, %s283
      %p289 = scmp.eq.s32.totalorder %s24, 0
      %p290 = por %p288, %p289
      %p291 = scmp.ne.s32.totalorder %s280, %s283
      %p292 = scmp.eq.s32.totalorder %s29, 1
      %p293 = por %p291, %p292
      %p294 = scmp.ne.s32.totalorder %s283, %s284
      %p295 = scmp.eq.s32.totalorder %s29, 0
      %p296 = por %p294, %p295
      %p297 = scmp.ne.s32.totalorder %s283, %s284
      %p298 = scmp.eq.s32.totalorder %s30, 1
      %p299 = por %p297, %p298
      %p301 = scmp.ne.s32.totalorder %s284, %s300
      %p302 = scmp.eq.s32.totalorder %s30, 0
      %p303 = por %p301, %p302
      %p304 = scmp.le.s32.totalorder 1, %s24
      %p305 = scmp.lt.s32.totalorder %s24, 3
      %p306 = pnand %p304, %p305
      %p307 = pneg %p306
      // Predicated region
      $region9: #{tpu_custom_call.1} parent=5 // pred_check
        _
      $region10: #{tpu_custom_call.1} parent=5 // pred_check_branch
        %309 = sbr.rel (%p306) target = $region12
      $region11: #{tpu_custom_call.1} parent=5 // pred_region
        %s310 = ssub.s32 %s24, 1
        // Predicated region
        $region13: #{tpu_custom_call.1} parent=11 // pred_check
          %p311 = pneg %p97
        $region14: #{tpu_custom_call.1} parent=11 // pred_check_branch
          %313 = sbr.rel (%p311) target = $region16
        $region15: #{tpu_custom_call.1} parent=11 // pred_region
          _
        $region16: #{tpu_custom_call.1} parent=11 // pred_fallthru
          _
        // Predicated region
        $region17: #{tpu_custom_call.1} parent=11 // pred_check
          %p314 = pneg %p118
        $region18: #{tpu_custom_call.1} parent=11 // pred_check_branch
          %316 = sbr.rel (%p314) target = $region20
        $region19: #{tpu_custom_call.1} parent=11 // pred_region
          _
        $region20: #{tpu_custom_call.1} parent=11 // pred_fallthru
          _
        // Predicated region
        $region21: #{tpu_custom_call.1} parent=11 // pred_check
          %p317 = pneg %p139
        $region22: #{tpu_custom_call.1} parent=11 // pred_check_branch
          %319 = sbr.rel (%p317) target = $region24
        $region23: #{tpu_custom_call.1} parent=11 // pred_region
          _
        $region24: #{tpu_custom_call.1} parent=11 // pred_fallthru
          _
        // Predicated region
        $region25: #{tpu_custom_call.1} parent=11 // pred_check
          %p320 = pneg %p160
        $region26: #{tpu_custom_call.1} parent=11 // pred_check_branch
          %322 = sbr.rel (%p320) target = $region28
        $region27: #{tpu_custom_call.1} parent=11 // pred_region
          _
        $region28: #{tpu_custom_call.1} parent=11 // pred_fallthru
          _
        // Predicated region
        $region29: #{tpu_custom_call.1} parent=11 // pred_check
          %p323 = pneg %p181
        $region30: #{tpu_custom_call.1} parent=11 // pred_check_branch
          %325 = sbr.rel (%p323) target = $region32
        $region31: #{tpu_custom_call.1} parent=11 // pred_region
          _
        $region32: #{tpu_custom_call.1} parent=11 // pred_fallthru
          _
        // Predicated region
        $region33: #{tpu_custom_call.1} parent=11 // pred_check
          %p326 = pneg %p202
        $region34: #{tpu_custom_call.1} parent=11 // pred_check_branch
          %328 = sbr.rel (%p326) target = $region36
        $region35: #{tpu_custom_call.1} parent=11 // pred_region
          _
        $region36: #{tpu_custom_call.1} parent=11 // pred_fallthru
          _
        // Predicated region
        $region37: #{tpu_custom_call.1} parent=11 // pred_check
          %p329 = pneg %p223
        $region38: #{tpu_custom_call.1} parent=11 // pred_check_branch
          %331 = sbr.rel (%p329) target = $region40
        $region39: #{tpu_custom_call.1} parent=11 // pred_region
          _
        $region40: #{tpu_custom_call.1} parent=11 // pred_fallthru
          _
        // Predicated region
        $region41: #{tpu_custom_call.1} parent=11 // pred_check
          %p332 = pneg %p244
        $region42: #{tpu_custom_call.1} parent=11 // pred_check_branch
          %334 = sbr.rel (%p332) target = $region44
        $region43: #{tpu_custom_call.1} parent=11 // pred_region
          _
        $region44: #{tpu_custom_call.1} parent=11 // pred_fallthru
          _
      $region12: #{tpu_custom_call.1} parent=5 // pred_fallthru
        _
      %p335 = scmp.lt.s32.totalorder %s24, 2
      // Predicated region
      $region45: #{tpu_custom_call.1} parent=5 // pred_check
        %p336 = pneg %p335
      $region46: #{tpu_custom_call.1} parent=5 // pred_check_branch
        %338 = sbr.rel (%p336) target = $region48
      $region47: #{tpu_custom_call.1} parent=5 // pred_region
        // Predicated region
        $region49: #{tpu_custom_call.1} parent=47 // pred_check
          %p339 = pneg %p44
        $region50: #{tpu_custom_call.1} parent=47 // pred_check_branch
          %341 = sbr.rel (%p339) target = $region52
        $region51: #{tpu_custom_call.1} parent=47 // pred_region
          %p342 = scmp.lt.s32.totalorder %s24, 1
          %s343 = scalar_select %p342, %s24, 1
          %s344 = smul.addr %s343, 36
          %s345 = smul.addr %s344, 8
          %s346 = scalar_lea.vmem %s0, %s345
        $region52: #{tpu_custom_call.1} parent=47 // pred_fallthru
          _
        // Predicated region
        $region53: #{tpu_custom_call.1} parent=47 // pred_check
          %p347 = pneg %p70
        $region54: #{tpu_custom_call.1} parent=47 // pred_check_branch
          %349 = sbr.rel (%p347) target = $region56
        $region55: #{tpu_custom_call.1} parent=47 // pred_region
          %p350 = scmp.lt.s32.totalorder %s24, 1
          %s351 = scalar_select %p350, %s24, 1
          %s352 = smul.addr %s351, 36
          %s353 = smul.addr %s352, 8
          %s354 = scalar_lea.vmem %s1, %s353
        $region56: #{tpu_custom_call.1} parent=47 // pred_fallthru
          _
      $region48: #{tpu_custom_call.1} parent=5 // pred_fallthru
        _
      %p355 = scmp.le.s32.totalorder 1, %s24
      %p356 = scmp.lt.s32.totalorder %s24, 3
      %p357 = pnand %p355, %p356
      %p358 = pneg %p357
      // Predicated region
      $region57: #{tpu_custom_call.1} parent=5 // pred_check
        _
      $region58: #{tpu_custom_call.1} parent=5 // pred_check_branch
        %360 = sbr.rel (%p357) target = $region60
      $region59: #{tpu_custom_call.1} parent=5 // pred_region
        %s361 = ssub.s32 %s24, 1
        %p362 = scmp.lt.s32.totalorder %s29, 1
        %s363 = scalar_select %p362, %s29, 1
        %s364 = smul.addr %s363, 36
        %s365 = smul.addr %s364, 8
        %s366 = scalar_lea.vmem %s0, %s365
        %p367 = pneg %p50
        %p368 = pneg %p47
        %p369 = scmp.lt.s32.totalorder %s29, 1
        %s370 = scalar_select %p369, %s29, 1
        %s371 = smul.addr %s370, 36
        %s372 = smul.addr %s371, 8
        %s373 = scalar_lea.vmem %s1, %s372
        %p374 = pneg %p76
        %p375 = pneg %p73
        %p376 = pneg %p97
        %p377 = pneg %p94
        %p378 = pneg %p118
        %p379 = pneg %p115
        %p380 = pneg %p139
        %p381 = pneg %p136
        %p382 = pneg %p160
        %p383 = pneg %p157
        %p384 = pneg %p181
        %p385 = pneg %p178
        %p386 = pneg %p202
        %p387 = pneg %p199
        %p388 = pneg %p223
        %p389 = pneg %p220
        %p390 = pneg %p244
        %p391 = pneg %p241
        %p392 = pneg %p270
        %p393 = pneg %p267
        %s394 = sand.u32 %s257, 1
        %s395 = scalar_lea.sflag [#allocation3], %s394
        %s396 = sand.u32 %s257, 1
        %s397 = smul.addr %s396, 64
        %s398 = scalar_lea.vmem [#allocation2], %s397
        %p399 = pneg %p296
        %p400 = pneg %p293
        %s401 = sand.u32 %s283, 1
        %s402 = scalar_lea.sflag [#allocation5], %s401
        %s403 = sand.u32 %s283, 1
        %s404 = smul.addr %s403, 64
        %s405 = scalar_lea.vmem [#allocation4], %s404
        %p406 = scmp.lt.s32.totalorder %s29, 1
        %s407 = scalar_select %p406, %s29, 1
        %s408 = smul.addr %s407, 36
        %s409 = smul.addr %s408, 8
        %s410 = scalar_lea.vmem %s0, %s409
        %p411 = scmp.lt.s32.totalorder %s29, 1
        %s412 = scalar_select %p411, %s29, 1
        %s413 = smul.addr %s412, 36
        %s414 = smul.addr %s413, 8
        %s415 = scalar_lea.vmem %s1, %s414
        %v416 = vld [vmem:[%s4] sm:$0x1]
        %v417 = vld [vmem:[%s5] sm:$0x1]
        %v418 = vld [vmem:[%s410] sm:$0xff]
        %v419 = vld [vmem:[%s410 + $0x8] sm:$0x1]
        %v420 = vld [vmem:[%s410 + $0x10] sm:$0xff]
        %v421 = vld [vmem:[%s410 + $0x18] sm:$0x1]
        %v422 = vld [vmem:[%s410 + $0x20] sm:$0xff]
        %v423 = vld [vmem:[%s410 + $0x28] sm:$0x1]
        %v424 = vld [vmem:[%s410 + $0x30] sm:$0xff]
        %v425 = vld [vmem:[%s410 + $0x38] sm:$0x1]
        %v426 = vld [vmem:[%s410 + $0x40] sm:$0xff]
        %v427 = vld [vmem:[%s410 + $0x48] sm:$0x1]
        %v428 = vld [vmem:[%s410 + $0x50] sm:$0xff]
        %v429 = vld [vmem:[%s410 + $0x58] sm:$0x1]
        %v430 = vld [vmem:[%s410 + $0x60] sm:$0xff]
        %v431 = vld [vmem:[%s410 + $0x68] sm:$0x1]
        %v432 = vld [vmem:[%s410 + $0x70] sm:$0xff]
        %v433 = vld [vmem:[%s410 + $0x78] sm:$0x1]
        %v434 = vld [vmem:[%s410 + $0x80] sm:$0xff]
        %v435 = vld [vmem:[%s410 + $0x88] sm:$0x1]
        %v436 = vld [vmem:[%s410 + $0x90] sm:$0xff]
        %v437 = vld [vmem:[%s410 + $0x98] sm:$0x1]
        %v438 = vld [vmem:[%s410 + $0xa0] sm:$0xff]
        %v439 = vld [vmem:[%s410 + $0xa8] sm:$0x1]
        %v440 = vld [vmem:[%s410 + $0xb0] sm:$0xff]
        %v441 = vld [vmem:[%s410 + $0xb8] sm:$0x1]
        %v442 = vld [vmem:[%s410 + $0xc0] sm:$0xff]
        %v443 = vld [vmem:[%s410 + $0xc8] sm:$0x1]
        %v444 = vld [vmem:[%s410 + $0xd0] sm:$0xff]
        %v445 = vld [vmem:[%s410 + $0xd8] sm:$0x1]
        %v446 = vld [vmem:[%s410 + $0xe0] sm:$0xff]
        %v447 = vld [vmem:[%s410 + $0xe8] sm:$0x1]
        %v448 = vld [vmem:[%s410 + $0xf0] sm:$0xff]
        %v449 = vld [vmem:[%s410 + $0xf8] sm:$0x1]
        %v450 = vld [vmem:[%s410 + $0x100] sm:$0xff]
        %v451 = vld [vmem:[%s410 + $0x108] sm:$0x1]
        %v452 = vld [vmem:[%s2] sm:$0xff]
        %v453 = vld [vmem:[%s2 + $0x8] sm:$0x1]
        %v454 = vld [vmem:[%s2 + $0x10] sm:$0xff]
        %v455 = vld [vmem:[%s2 + $0x18] sm:$0x1]
        %v456 = vld [vmem:[%s2 + $0x20] sm:$0xff]
        %v457 = vld [vmem:[%s2 + $0x28] sm:$0x1]
        %v458 = vld [vmem:[%s2 + $0x30] sm:$0xff]
        %v459 = vld [vmem:[%s2 + $0x38] sm:$0x1]
        %v460 = vld [vmem:[%s2 + $0x40] sm:$0xff]
        %v461 = vld [vmem:[%s2 + $0x48] sm:$0x1]
        %v462 = vld [vmem:[%s2 + $0x50] sm:$0xff]
        %v463 = vld [vmem:[%s2 + $0x58] sm:$0x1]
        %v464 = vld [vmem:[%s2 + $0x60] sm:$0xff]
        %v465 = vld [vmem:[%s2 + $0x68] sm:$0x1]
        %v466 = vld [vmem:[%s2 + $0x70] sm:$0xff]
        %v467 = vld [vmem:[%s2 + $0x78] sm:$0x1]
        %v468 = vld [vmem:[%s2 + $0x80] sm:$0xff]
        %v469 = vld [vmem:[%s2 + $0x88] sm:$0x1]
        %v470 = vld [vmem:[%s2 + $0x90] sm:$0xff]
        %v471 = vld [vmem:[%s2 + $0x98] sm:$0x1]
        %v472 = vld [vmem:[%s2 + $0xa0] sm:$0xff]
        %v473 = vld [vmem:[%s2 + $0xa8] sm:$0x1]
        %v474 = vld [vmem:[%s2 + $0xb0] sm:$0xff]
        %v475 = vld [vmem:[%s2 + $0xb8] sm:$0x1]
        %v476 = vld [vmem:[%s2 + $0xc0] sm:$0xff]
        %v477 = vld [vmem:[%s2 + $0xc8] sm:$0x1]
        %v478 = vld [vmem:[%s2 + $0xd0] sm:$0xff]
        %v479 = vld [vmem:[%s2 + $0xd8] sm:$0x1]
        %v480 = vld [vmem:[%s2 + $0xe0] sm:$0xff]
        %v481 = vld [vmem:[%s2 + $0xe8] sm:$0x1]
        %v482 = vld [vmem:[%s2 + $0xf0] sm:$0xff]
        %v483 = vld [vmem:[%s2 + $0xf8] sm:$0x1]
        %v484 = vld [vmem:[%s2 + $0x100] sm:$0xff]
        %v485 = vld [vmem:[%s2 + $0x108] sm:$0x1]
        %v487 = vperm.slane %v416, 0
        %v489 = vmul.f32 %v418, %v487
        %v490 = vmul.f32 %v419, %v487
        %v491 = vmul.f32 %v420, %v487
        %v492 = vmul.f32 %v421, %v487
        %v493 = vmul.f32 %v422, %v487
        %v494 = vmul.f32 %v423, %v487
        %v495 = vmul.f32 %v424, %v487
        %v496 = vmul.f32 %v425, %v487
        %v497 = vmul.f32 %v426, %v487
        %v498 = vmul.f32 %v427, %v487
        %v499 = vmul.f32 %v428, %v487
        %v500 = vmul.f32 %v429, %v487
        %v501 = vmul.f32 %v430, %v487
        %v502 = vmul.f32 %v431, %v487
        %v503 = vmul.f32 %v432, %v487
        %v504 = vmul.f32 %v433, %v487
        %v505 = vmul.f32 %v434, %v487
        %v506 = vmul.f32 %v435, %v487
        %v507 = vmul.f32 %v436, %v487
        %v508 = vmul.f32 %v437, %v487
        %v509 = vmul.f32 %v438, %v487
        %v510 = vmul.f32 %v439, %v487
        %v511 = vmul.f32 %v440, %v487
        %v512 = vmul.f32 %v441, %v487
        %v513 = vmul.f32 %v442, %v487
        %v514 = vmul.f32 %v443, %v487
        %v515 = vmul.f32 %v444, %v487
        %v516 = vmul.f32 %v445, %v487
        %v517 = vmul.f32 %v446, %v487
        %v518 = vmul.f32 %v447, %v487
        %v519 = vmul.f32 %v448, %v487
        %v520 = vmul.f32 %v449, %v487
        %v521 = vmul.f32 %v450, %v487
        %v522 = vmul.f32 %v451, %v487
        %v524 = vperm.slane %v417, 0
        %v526 = vadd.f32 %v489, %v524
        %v527 = vadd.f32 %v490, %v524
        %v528 = vadd.f32 %v491, %v524
        %v529 = vadd.f32 %v492, %v524
        %v530 = vadd.f32 %v493, %v524
        %v531 = vadd.f32 %v494, %v524
        %v532 = vadd.f32 %v495, %v524
        %v533 = vadd.f32 %v496, %v524
        %v534 = vadd.f32 %v497, %v524
        %v535 = vadd.f32 %v498, %v524
        %v536 = vadd.f32 %v499, %v524
        %v537 = vadd.f32 %v500, %v524
        %v538 = vadd.f32 %v501, %v524
        %v539 = vadd.f32 %v502, %v524
        %v540 = vadd.f32 %v503, %v524
        %v541 = vadd.f32 %v504, %v524
        %v542 = vadd.f32 %v505, %v524
        %v543 = vadd.f32 %v506, %v524
        %v544 = vadd.f32 %v507, %v524
        %v545 = vadd.f32 %v508, %v524
        %v546 = vadd.f32 %v509, %v524
        %v547 = vadd.f32 %v510, %v524
        %v548 = vadd.f32 %v511, %v524
        %v549 = vadd.f32 %v512, %v524
        %v550 = vadd.f32 %v513, %v524
        %v551 = vadd.f32 %v514, %v524
        %v552 = vadd.f32 %v515, %v524
        %v553 = vadd.f32 %v516, %v524
        %v554 = vadd.f32 %v517, %v524
        %v555 = vadd.f32 %v518, %v524
        %v556 = vadd.f32 %v519, %v524
        %v557 = vadd.f32 %v520, %v524
        %v558 = vadd.f32 %v521, %v524
        %v559 = vadd.f32 %v522, %v524
        %v560 = vmax.f32 %v526, 0.0
        %v561 = vmax.f32 %v527, 0.0
        %v562 = vmax.f32 %v528, 0.0
        %v563 = vmax.f32 %v529, 0.0
        %v564 = vmax.f32 %v530, 0.0
        %v565 = vmax.f32 %v531, 0.0
        %v566 = vmax.f32 %v532, 0.0
        %v567 = vmax.f32 %v533, 0.0
        %v568 = vmax.f32 %v534, 0.0
        %v569 = vmax.f32 %v535, 0.0
        %v570 = vmax.f32 %v536, 0.0
        %v571 = vmax.f32 %v537, 0.0
        %v572 = vmax.f32 %v538, 0.0
        %v573 = vmax.f32 %v539, 0.0
        %v574 = vmax.f32 %v540, 0.0
        %v575 = vmax.f32 %v541, 0.0
        %v576 = vmax.f32 %v542, 0.0
        %v577 = vmax.f32 %v543, 0.0
        %v578 = vmax.f32 %v544, 0.0
        %v579 = vmax.f32 %v545, 0.0
        %v580 = vmax.f32 %v546, 0.0
        %v581 = vmax.f32 %v547, 0.0
        %v582 = vmax.f32 %v548, 0.0
        %v583 = vmax.f32 %v549, 0.0
        %v584 = vmax.f32 %v550, 0.0
        %v585 = vmax.f32 %v551, 0.0
        %v586 = vmax.f32 %v552, 0.0
        %v587 = vmax.f32 %v553, 0.0
        %v588 = vmax.f32 %v554, 0.0
        %v589 = vmax.f32 %v555, 0.0
        %v590 = vmax.f32 %v556, 0.0
        %v591 = vmax.f32 %v557, 0.0
        %v592 = vmax.f32 %v558, 0.0
        %v593 = vmax.f32 %v559, 0.0
        %v594 = vmul.f32 %v452, %v560
        %v595 = vmul.f32 %v453, %v561
        %v596 = vmul.f32 %v454, %v562
        %v597 = vmul.f32 %v455, %v563
        %v598 = vmul.f32 %v456, %v564
        %v599 = vmul.f32 %v457, %v565
        %v600 = vmul.f32 %v458, %v566
        %v601 = vmul.f32 %v459, %v567
        %v602 = vmul.f32 %v460, %v568
        %v603 = vmul.f32 %v461, %v569
        %v604 = vmul.f32 %v462, %v570
        %v605 = vmul.f32 %v463, %v571
        %v606 = vmul.f32 %v464, %v572
        %v607 = vmul.f32 %v465, %v573
        %v608 = vmul.f32 %v466, %v574
        %v609 = vmul.f32 %v467, %v575
        %v610 = vmul.f32 %v468, %v576
        %v611 = vmul.f32 %v469, %v577
        %v612 = vmul.f32 %v470, %v578
        %v613 = vmul.f32 %v471, %v579
        %v614 = vmul.f32 %v472, %v580
        %v615 = vmul.f32 %v473, %v581
        %v616 = vmul.f32 %v474, %v582
        %v617 = vmul.f32 %v475, %v583
        %v618 = vmul.f32 %v476, %v584
        %v619 = vmul.f32 %v477, %v585
        %v620 = vmul.f32 %v478, %v586
        %v621 = vmul.f32 %v479, %v587
        %v622 = vmul.f32 %v480, %v588
        %v623 = vmul.f32 %v481, %v589
        %v624 = vmul.f32 %v482, %v590
        %v625 = vmul.f32 %v483, %v591
        %v626 = vmul.f32 %v484, %v592
        %v627 = vmul.f32 %v485, %v593
        %v628 = vld [vmem:[%s415] sm:$0xff]
        %v629 = vld [vmem:[%s415 + $0x10] sm:$0xff]
        %v630 = vld [vmem:[%s415 + $0x20] sm:$0xff]
        %v631 = vld [vmem:[%s415 + $0x30] sm:$0xff]
        %v632 = vld [vmem:[%s415 + $0x40] sm:$0xff]
        %v633 = vld [vmem:[%s415 + $0x50] sm:$0xff]
        %v634 = vld [vmem:[%s415 + $0x60] sm:$0xff]
        %v635 = vld [vmem:[%s415 + $0x70] sm:$0xff]
        %v636 = vld [vmem:[%s415 + $0x80] sm:$0xff]
        %v637 = vld [vmem:[%s415 + $0x90] sm:$0xff]
        %v638 = vld [vmem:[%s415 + $0xa0] sm:$0xff]
        %v639 = vld [vmem:[%s415 + $0xb0] sm:$0xff]
        %v640 = vld [vmem:[%s415 + $0xc0] sm:$0xff]
        %v641 = vld [vmem:[%s415 + $0xd0] sm:$0xff]
        %v642 = vld [vmem:[%s415 + $0xe0] sm:$0xff]
        %v643 = vld [vmem:[%s415 + $0xf0] sm:$0xff]
        %v644 = vld [vmem:[%s415 + $0x100] sm:$0xff]
        %v645 = vld [vmem:[%s3] sm:$0xff]
        %v646 = vld [vmem:[%s3 + $0x10] sm:$0xff]
        %v647 = vld [vmem:[%s3 + $0x20] sm:$0xff]
        %v648 = vld [vmem:[%s3 + $0x30] sm:$0xff]
        %v649 = vld [vmem:[%s3 + $0x40] sm:$0xff]
        %v650 = vld [vmem:[%s3 + $0x50] sm:$0xff]
        %v651 = vld [vmem:[%s3 + $0x60] sm:$0xff]
        %v652 = vld [vmem:[%s3 + $0x70] sm:$0xff]
        %v653 = vld [vmem:[%s3 + $0x80] sm:$0xff]
        %v654 = vld [vmem:[%s3 + $0x90] sm:$0xff]
        %v655 = vld [vmem:[%s3 + $0xa0] sm:$0xff]
        %v656 = vld [vmem:[%s3 + $0xb0] sm:$0xff]
        %v657 = vld [vmem:[%s3 + $0xc0] sm:$0xff]
        %v658 = vld [vmem:[%s3 + $0xd0] sm:$0xff]
        %v659 = vld [vmem:[%s3 + $0xe0] sm:$0xff]
        %v660 = vld [vmem:[%s3 + $0xf0] sm:$0xff]
        %v661 = vld [vmem:[%s3 + $0x100] sm:$0xff]
        %v662 = vmul.f32 %v628, %v487
        %v663 = vmul.f32 %v629, %v487
        %v664 = vmul.f32 %v630, %v487
        %v665 = vmul.f32 %v631, %v487
        %v666 = vmul.f32 %v632, %v487
        %v667 = vmul.f32 %v633, %v487
        %v668 = vmul.f32 %v634, %v487
        %v669 = vmul.f32 %v635, %v487
        %v670 = vmul.f32 %v636, %v487
        %v671 = vmul.f32 %v637, %v487
        %v672 = vmul.f32 %v638, %v487
        %v673 = vmul.f32 %v639, %v487
        %v674 = vmul.f32 %v640, %v487
        %v675 = vmul.f32 %v641, %v487
        %v676 = vmul.f32 %v642, %v487
        %v677 = vmul.f32 %v643, %v487
        %v678 = vmul.f32 %v644, %v487
        %v679 = vadd.f32 %v662, %v524
        %v680 = vadd.f32 %v663, %v524
        %v681 = vadd.f32 %v664, %v524
        %v682 = vadd.f32 %v665, %v524
        %v683 = vadd.f32 %v666, %v524
        %v684 = vadd.f32 %v667, %v524
        %v685 = vadd.f32 %v668, %v524
        %v686 = vadd.f32 %v669, %v524
        %v687 = vadd.f32 %v670, %v524
        %v688 = vadd.f32 %v671, %v524
        %v689 = vadd.f32 %v672, %v524
        %v690 = vadd.f32 %v673, %v524
        %v691 = vadd.f32 %v674, %v524
        %v692 = vadd.f32 %v675, %v524
        %v693 = vadd.f32 %v676, %v524
        %v694 = vadd.f32 %v677, %v524
        %v695 = vadd.f32 %v678, %v524
        %v696 = vmax.f32 %v679, 0.0
        %v697 = vmax.f32 %v680, 0.0
        %v698 = vmax.f32 %v681, 0.0
        %v699 = vmax.f32 %v682, 0.0
        %v700 = vmax.f32 %v683, 0.0
        %v701 = vmax.f32 %v684, 0.0
        %v702 = vmax.f32 %v685, 0.0
        %v703 = vmax.f32 %v686, 0.0
        %v704 = vmax.f32 %v687, 0.0
        %v705 = vmax.f32 %v688, 0.0
        %v706 = vmax.f32 %v689, 0.0
        %v707 = vmax.f32 %v690, 0.0
        %v708 = vmax.f32 %v691, 0.0
        %v709 = vmax.f32 %v692, 0.0
        %v710 = vmax.f32 %v693, 0.0
        %v711 = vmax.f32 %v694, 0.0
        %v712 = vmax.f32 %v695, 0.0
        %v713 = vmul.f32 %v645, %v696
        %v714 = vmul.f32 %v646, %v697
        %v715 = vmul.f32 %v647, %v698
        %v716 = vmul.f32 %v648, %v699
        %v717 = vmul.f32 %v649, %v700
        %v718 = vmul.f32 %v650, %v701
        %v719 = vmul.f32 %v651, %v702
        %v720 = vmul.f32 %v652, %v703
        %v721 = vmul.f32 %v653, %v704
        %v722 = vmul.f32 %v654, %v705
        %v723 = vmul.f32 %v655, %v706
        %v724 = vmul.f32 %v656, %v707
        %v725 = vmul.f32 %v657, %v708
        %v726 = vmul.f32 %v658, %v709
        %v727 = vmul.f32 %v659, %v710
        %v728 = vmul.f32 %v660, %v711
        %v729 = vmul.f32 %v661, %v712
        %v730 = vld [vmem:[%s6] sm:$0xf]
        %v731 = vld [vmem:[%s8] sm:$0xf]
        %s732 = scalar_lea.vmem %s6, 4
        %v733 = vld [vmem:[%s732] sm:$0xf]
        %vm734 = vcmask 31744
        %v736 = vsel %vm734, %v713, 0
        %v739 = vsel %vm734, %v715, 0
        %v742 = vsel %vm734, %v717, 0
        %v745 = vsel %vm734, %v719, 0
        %v748 = vsel %vm734, %v721, 0
        %v751 = vsel %vm734, %v723, 0
        %v754 = vsel %vm734, %v725, 0
        %v757 = vsel %vm734, %v727, 0
        %vm759 = vcmask 1043456
        %v761 = vsel %vm759, %v733, 0
        %763 = vmatpush.msra.mxu0 0.0
        %764 = vmatpush.msra.mxu0 0.0
        %765 = vmatpush.msra.mxu0 0.0
        %766 = vmatpush.msra.mxu0 0.0
        %767 = vmatpush.msra.mxu0 0.0
        %768 = vmatpush.msra.mxu0 0.0
        %769 = vmatpush.msra.mxu0 0.0
        %770 = vmatpush.msra.mxu0 0.0
        %771 = vmatpush.msra.mxu0 0.0
        %772 = vmatpush.msra.mxu0 0.0
        %773 = vmatpush.msra.mxu0 0.0
        %774 = vmatpush.msra.mxu0 0.0
        %775 = vmatpush.msra.mxu0 0.0
        %776 = vmatpush.msra.mxu0 0.0
        %777 = vmatpush.msra.mxu0 0.0
        %778 = vmatpush.msra.mxu0 %v761
        %779 = vmatmul.f32.gmra.mxu0 %v736
        %v780 = vpop.f32.mrf.mxu0
        %v781 = vadd.f32 0.0, %v780
        %782 = vmatmul.f32.gmra.mxu0 %v739
        %v783 = vpop.f32.mrf.mxu0
        %v784 = vadd.f32 0.0, %v783
        %785 = vmatmul.f32.gmra.mxu0 %v742
        %v786 = vpop.f32.mrf.mxu0
        %v787 = vadd.f32 0.0, %v786
        %788 = vmatmul.f32.gmra.mxu0 %v745
        %v789 = vpop.f32.mrf.mxu0
        %v790 = vadd.f32 0.0, %v789
        %791 = vmatmul.f32.gmra.mxu0 %v748
        %v792 = vpop.f32.mrf.mxu0
        %v793 = vadd.f32 0.0, %v792
        %794 = vmatmul.f32.gmra.mxu0 %v751
        %v795 = vpop.f32.mrf.mxu0
        %v796 = vadd.f32 0.0, %v795
        %797 = vmatmul.f32.gmra.mxu0 %v754
        %v798 = vpop.f32.mrf.mxu0
        %v799 = vadd.f32 0.0, %v798
        %800 = vmatmul.f32.gmra.mxu0 %v757
        %v801 = vpop.f32.mrf.mxu0
        %v802 = vadd.f32 0.0, %v801
        %803 = vdwg.mxu0
        %v805 = vsel %vm734, %v594, 0
        %v808 = vsel %vm734, %v598, 0
        %v811 = vsel %vm734, %v602, 0
        %v814 = vsel %vm734, %v606, 0
        %v817 = vsel %vm734, %v610, 0
        %v820 = vsel %vm734, %v614, 0
        %v823 = vsel %vm734, %v618, 0
        %v826 = vsel %vm734, %v622, 0
        %v829 = vsel %vm759, %v730, 0
        %831 = vmatpush.msra.mxu0 0.0
        %832 = vmatpush.msra.mxu0 0.0
        %833 = vmatpush.msra.mxu0 0.0
        %834 = vmatpush.msra.mxu0 0.0
        %835 = vmatpush.msra.mxu0 0.0
        %836 = vmatpush.msra.mxu0 0.0
        %837 = vmatpush.msra.mxu0 0.0
        %838 = vmatpush.msra.mxu0 0.0
        %839 = vmatpush.msra.mxu0 0.0
        %840 = vmatpush.msra.mxu0 0.0
        %841 = vmatpush.msra.mxu0 0.0
        %842 = vmatpush.msra.mxu0 0.0
        %843 = vmatpush.msra.mxu0 0.0
        %844 = vmatpush.msra.mxu0 0.0
        %845 = vmatpush.msra.mxu0 0.0
        %846 = vmatpush.msra.mxu0 %v829
        %847 = vmatmul.f32.gmra.mxu0 %v805
        %v848 = vpop.f32.mrf.mxu0
        %v849 = vadd.f32 %v781, %v848
        %850 = vmatmul.f32.gmra.mxu0 %v808
        %v851 = vpop.f32.mrf.mxu0
        %v852 = vadd.f32 %v784, %v851
        %853 = vmatmul.f32.gmra.mxu0 %v811
        %v854 = vpop.f32.mrf.mxu0
        %v855 = vadd.f32 %v787, %v854
        %856 = vmatmul.f32.gmra.mxu0 %v814
        %v857 = vpop.f32.mrf.mxu0
        %v858 = vadd.f32 %v790, %v857
        %859 = vmatmul.f32.gmra.mxu0 %v817
        %v860 = vpop.f32.mrf.mxu0
        %v861 = vadd.f32 %v793, %v860
        %862 = vmatmul.f32.gmra.mxu0 %v820
        %v863 = vpop.f32.mrf.mxu0
        %v864 = vadd.f32 %v796, %v863
        %865 = vmatmul.f32.gmra.mxu0 %v823
        %v866 = vpop.f32.mrf.mxu0
        %v867 = vadd.f32 %v799, %v866
        %868 = vmatmul.f32.gmra.mxu0 %v826
        %v869 = vpop.f32.mrf.mxu0
        %v870 = vadd.f32 %v802, %v869
        %871 = vdwg.mxu0
        %s872 = scalar_lea.vmem %s8, 4
        %v873 = vld [vmem:[%s872] sm:$0xf]
        %v875 = vsel %vm734, %v628, 0
        %v878 = vsel %vm734, %v630, 0
        %v881 = vsel %vm734, %v632, 0
        %v884 = vsel %vm734, %v634, 0
        %v887 = vsel %vm734, %v636, 0
        %v890 = vsel %vm734, %v638, 0
        %v893 = vsel %vm734, %v640, 0
        %v896 = vsel %vm734, %v642, 0
        %v899 = vsel %vm759, %v873, 0
        %901 = vmatpush.msra.mxu0 0.0
        %902 = vmatpush.msra.mxu0 0.0
        %903 = vmatpush.msra.mxu0 0.0
        %904 = vmatpush.msra.mxu0 0.0
        %905 = vmatpush.msra.mxu0 0.0
        %906 = vmatpush.msra.mxu0 0.0
        %907 = vmatpush.msra.mxu0 0.0
        %908 = vmatpush.msra.mxu0 0.0
        %909 = vmatpush.msra.mxu0 0.0
        %910 = vmatpush.msra.mxu0 0.0
        %911 = vmatpush.msra.mxu0 0.0
        %912 = vmatpush.msra.mxu0 0.0
        %913 = vmatpush.msra.mxu0 0.0
        %914 = vmatpush.msra.mxu0 0.0
        %915 = vmatpush.msra.mxu0 0.0
        %916 = vmatpush.msra.mxu0 %v899
        %917 = vmatmul.f32.gmra.mxu0 %v875
        %v918 = vpop.f32.mrf.mxu0
        %v919 = vadd.f32 0.0, %v918
        %920 = vmatmul.f32.gmra.mxu0 %v878
        %v921 = vpop.f32.mrf.mxu0
        %v922 = vadd.f32 0.0, %v921
        %923 = vmatmul.f32.gmra.mxu0 %v881
        %v924 = vpop.f32.mrf.mxu0
        %v925 = vadd.f32 0.0, %v924
        %926 = vmatmul.f32.gmra.mxu0 %v884
        %v927 = vpop.f32.mrf.mxu0
        %v928 = vadd.f32 0.0, %v927
        %929 = vmatmul.f32.gmra.mxu0 %v887
        %v930 = vpop.f32.mrf.mxu0
        %v931 = vadd.f32 0.0, %v930
        %932 = vmatmul.f32.gmra.mxu0 %v890
        %v933 = vpop.f32.mrf.mxu0
        %v934 = vadd.f32 0.0, %v933
        %935 = vmatmul.f32.gmra.mxu0 %v893
        %v936 = vpop.f32.mrf.mxu0
        %v937 = vadd.f32 0.0, %v936
        %938 = vmatmul.f32.gmra.mxu0 %v896
        %v939 = vpop.f32.mrf.mxu0
        %v940 = vadd.f32 0.0, %v939
        %941 = vdwg.mxu0
        %v943 = vsel %vm734, %v418, 0
        %v946 = vsel %vm734, %v422, 0
        %v949 = vsel %vm734, %v426, 0
        %v952 = vsel %vm734, %v430, 0
        %v955 = vsel %vm734, %v434, 0
        %v958 = vsel %vm734, %v438, 0
        %v961 = vsel %vm734, %v442, 0
        %v964 = vsel %vm734, %v446, 0
        %v967 = vsel %vm759, %v731, 0
        %969 = vmatpush.msra.mxu0 0.0
        %970 = vmatpush.msra.mxu0 0.0
        %971 = vmatpush.msra.mxu0 0.0
        %972 = vmatpush.msra.mxu0 0.0
        %973 = vmatpush.msra.mxu0 0.0
        %974 = vmatpush.msra.mxu0 0.0
        %975 = vmatpush.msra.mxu0 0.0
        %976 = vmatpush.msra.mxu0 0.0
        %977 = vmatpush.msra.mxu0 0.0
        %978 = vmatpush.msra.mxu0 0.0
        %979 = vmatpush.msra.mxu0 0.0
        %980 = vmatpush.msra.mxu0 0.0
        %981 = vmatpush.msra.mxu0 0.0
        %982 = vmatpush.msra.mxu0 0.0
        %983 = vmatpush.msra.mxu0 0.0
        %984 = vmatpush.msra.mxu0 %v967
        %985 = vmatmul.f32.gmra.mxu0 %v943
        %v986 = vpop.f32.mrf.mxu0
        %v987 = vadd.f32 %v919, %v986
        %988 = vmatmul.f32.gmra.mxu0 %v946
        %v989 = vpop.f32.mrf.mxu0
        %v990 = vadd.f32 %v922, %v989
        %991 = vmatmul.f32.gmra.mxu0 %v949
        %v992 = vpop.f32.mrf.mxu0
        %v993 = vadd.f32 %v925, %v992
        %994 = vmatmul.f32.gmra.mxu0 %v952
        %v995 = vpop.f32.mrf.mxu0
        %v996 = vadd.f32 %v928, %v995
        %997 = vmatmul.f32.gmra.mxu0 %v955
        %v998 = vpop.f32.mrf.mxu0
        %v999 = vadd.f32 %v931, %v998
        %1000 = vmatmul.f32.gmra.mxu0 %v958
        %v1001 = vpop.f32.mrf.mxu0
        %v1002 = vadd.f32 %v934, %v1001
        %1003 = vmatmul.f32.gmra.mxu0 %v961
        %v1004 = vpop.f32.mrf.mxu0
        %v1005 = vadd.f32 %v937, %v1004
        %1006 = vmatmul.f32.gmra.mxu0 %v964
        %v1007 = vpop.f32.mrf.mxu0
        %v1008 = vadd.f32 %v940, %v1007
        %1009 = vdwg.mxu0
        %vm1018 = vcmask 1046528
        %v1019 = vrot.slane %v594, 1
        %v1020 = vrot.slane %v595, 1
        %v1021 = vsel %vm1018, %v1019, %v1020
        %v1022 = vrot.slane %v598, 1
        %v1023 = vrot.slane %v599, 1
        %v1024 = vsel %vm1018, %v1022, %v1023
        %v1025 = vrot.slane %v602, 1
        %v1026 = vrot.slane %v603, 1
        %v1027 = vsel %vm1018, %v1025, %v1026
        %v1028 = vrot.slane %v606, 1
        %v1029 = vrot.slane %v607, 1
        %v1030 = vsel %vm1018, %v1028, %v1029
        %v1031 = vrot.slane %v610, 1
        %v1032 = vrot.slane %v611, 1
        %v1033 = vsel %vm1018, %v1031, %v1032
        %v1034 = vrot.slane %v614, 1
        %v1035 = vrot.slane %v615, 1
        %v1036 = vsel %vm1018, %v1034, %v1035
        %v1037 = vrot.slane %v618, 1
        %v1038 = vrot.slane %v619, 1
        %v1039 = vsel %vm1018, %v1037, %v1038
        %v1040 = vrot.slane %v622, 1
        %v1041 = vrot.slane %v623, 1
        %v1042 = vsel %vm1018, %v1040, %v1041
        %v1051 = vrot.slane %v418, 1
        %v1052 = vrot.slane %v419, 1
        %v1053 = vsel %vm1018, %v1051, %v1052
        %v1054 = vrot.slane %v422, 1
        %v1055 = vrot.slane %v423, 1
        %v1056 = vsel %vm1018, %v1054, %v1055
        %v1057 = vrot.slane %v426, 1
        %v1058 = vrot.slane %v427, 1
        %v1059 = vsel %vm1018, %v1057, %v1058
        %v1060 = vrot.slane %v430, 1
        %v1061 = vrot.slane %v431, 1
        %v1062 = vsel %vm1018, %v1060, %v1061
        %v1063 = vrot.slane %v434, 1
        %v1064 = vrot.slane %v435, 1
        %v1065 = vsel %vm1018, %v1063, %v1064
        %v1066 = vrot.slane %v438, 1
        %v1067 = vrot.slane %v439, 1
        %v1068 = vsel %vm1018, %v1066, %v1067
        %v1069 = vrot.slane %v442, 1
        %v1070 = vrot.slane %v443, 1
        %v1071 = vsel %vm1018, %v1069, %v1070
        %v1072 = vrot.slane %v446, 1
        %v1073 = vrot.slane %v447, 1
        %v1074 = vsel %vm1018, %v1072, %v1073
        %s1075 = scalar_lea.vmem %s6, 8
        %v1076 = vld [vmem:[%s1075] sm:$0xf]
        %v1077 = vsel %vm734, %v1021, 0
        %v1079 = vsel %vm734, %v1024, 0
        %v1081 = vsel %vm734, %v1027, 0
        %v1083 = vsel %vm734, %v1030, 0
        %v1085 = vsel %vm734, %v1033, 0
        %v1087 = vsel %vm734, %v1036, 0
        %v1089 = vsel %vm734, %v1039, 0
        %v1091 = vsel %vm734, %v1042, 0
        %v1094 = vsel %vm759, %v1076, 0
        %1096 = vmatpush.msra.mxu0 0.0
        %1097 = vmatpush.msra.mxu0 0.0
        %1098 = vmatpush.msra.mxu0 0.0
        %1099 = vmatpush.msra.mxu0 0.0
        %1100 = vmatpush.msra.mxu0 0.0
        %1101 = vmatpush.msra.mxu0 0.0
        %1102 = vmatpush.msra.mxu0 0.0
        %1103 = vmatpush.msra.mxu0 0.0
        %1104 = vmatpush.msra.mxu0 0.0
        %1105 = vmatpush.msra.mxu0 0.0
        %1106 = vmatpush.msra.mxu0 0.0
        %1107 = vmatpush.msra.mxu0 0.0
        %1108 = vmatpush.msra.mxu0 0.0
        %1109 = vmatpush.msra.mxu0 0.0
        %1110 = vmatpush.msra.mxu0 0.0
        %1111 = vmatpush.msra.mxu0 %v1094
        %1112 = vmatmul.f32.gmra.mxu0 %v1077
        %v1113 = vpop.f32.mrf.mxu0
        %v1114 = vadd.f32 0.0, %v1113
        %1115 = vmatmul.f32.gmra.mxu0 %v1079
        %v1116 = vpop.f32.mrf.mxu0
        %v1117 = vadd.f32 0.0, %v1116
        %1118 = vmatmul.f32.gmra.mxu0 %v1081
        %v1119 = vpop.f32.mrf.mxu0
        %v1120 = vadd.f32 0.0, %v1119
        %1121 = vmatmul.f32.gmra.mxu0 %v1083
        %v1122 = vpop.f32.mrf.mxu0
        %v1123 = vadd.f32 0.0, %v1122
        %1124 = vmatmul.f32.gmra.mxu0 %v1085
        %v1125 = vpop.f32.mrf.mxu0
        %v1126 = vadd.f32 0.0, %v1125
        %1127 = vmatmul.f32.gmra.mxu0 %v1087
        %v1128 = vpop.f32.mrf.mxu0
        %v1129 = vadd.f32 0.0, %v1128
        %1130 = vmatmul.f32.gmra.mxu0 %v1089
        %v1131 = vpop.f32.mrf.mxu0
        %v1132 = vadd.f32 0.0, %v1131
        %1133 = vmatmul.f32.gmra.mxu0 %v1091
        %v1134 = vpop.f32.mrf.mxu0
        %v1135 = vadd.f32 0.0, %v1134
        %1136 = vdwg.mxu0
        %v1137 = vadd.f32 %v849, %v1114
        %v1138 = vadd.f32 %v852, %v1117
        %v1139 = vadd.f32 %v855, %v1120
        %v1140 = vadd.f32 %v858, %v1123
        %v1141 = vadd.f32 %v861, %v1126
        %v1142 = vadd.f32 %v864, %v1129
        %v1143 = vadd.f32 %v867, %v1132
        %v1144 = vadd.f32 %v870, %v1135
        %s1145 = scalar_lea.vmem %s8, 8
        %v1146 = vld [vmem:[%s1145] sm:$0xf]
        %v1147 = vsel %vm734, %v1053, 0
        %v1149 = vsel %vm734, %v1056, 0
        %v1151 = vsel %vm734, %v1059, 0
        %v1153 = vsel %vm734, %v1062, 0
        %v1155 = vsel %vm734, %v1065, 0
        %v1157 = vsel %vm734, %v1068, 0
        %v1159 = vsel %vm734, %v1071, 0
        %v1161 = vsel %vm734, %v1074, 0
        %v1164 = vsel %vm759, %v1146, 0
        %1166 = vmatpush.msra.mxu0 0.0
        %1167 = vmatpush.msra.mxu0 0.0
        %1168 = vmatpush.msra.mxu0 0.0
        %1169 = vmatpush.msra.mxu0 0.0
        %1170 = vmatpush.msra.mxu0 0.0
        %1171 = vmatpush.msra.mxu0 0.0
        %1172 = vmatpush.msra.mxu0 0.0
        %1173 = vmatpush.msra.mxu0 0.0
        %1174 = vmatpush.msra.mxu0 0.0
        %1175 = vmatpush.msra.mxu0 0.0
        %1176 = vmatpush.msra.mxu0 0.0
        %1177 = vmatpush.msra.mxu0 0.0
        %1178 = vmatpush.msra.mxu0 0.0
        %1179 = vmatpush.msra.mxu0 0.0
        %1180 = vmatpush.msra.mxu0 0.0
        %1181 = vmatpush.msra.mxu0 %v1164
        %1182 = vmatmul.f32.gmra.mxu0 %v1147
        %v1183 = vpop.f32.mrf.mxu0
        %v1184 = vadd.f32 0.0, %v1183
        %1185 = vmatmul.f32.gmra.mxu0 %v1149
        %v1186 = vpop.f32.mrf.mxu0
        %v1187 = vadd.f32 0.0, %v1186
        %1188 = vmatmul.f32.gmra.mxu0 %v1151
        %v1189 = vpop.f32.mrf.mxu0
        %v1190 = vadd.f32 0.0, %v1189
        %1191 = vmatmul.f32.gmra.mxu0 %v1153
        %v1192 = vpop.f32.mrf.mxu0
        %v1193 = vadd.f32 0.0, %v1192
        %1194 = vmatmul.f32.gmra.mxu0 %v1155
        %v1195 = vpop.f32.mrf.mxu0
        %v1196 = vadd.f32 0.0, %v1195
        %1197 = vmatmul.f32.gmra.mxu0 %v1157
        %v1198 = vpop.f32.mrf.mxu0
        %v1199 = vadd.f32 0.0, %v1198
        %1200 = vmatmul.f32.gmra.mxu0 %v1159
        %v1201 = vpop.f32.mrf.mxu0
        %v1202 = vadd.f32 0.0, %v1201
        %1203 = vmatmul.f32.gmra.mxu0 %v1161
        %v1204 = vpop.f32.mrf.mxu0
        %v1205 = vadd.f32 0.0, %v1204
        %1206 = vdwg.mxu0
        %v1207 = vadd.f32 %v987, %v1184
        %v1208 = vadd.f32 %v990, %v1187
        %v1209 = vadd.f32 %v993, %v1190
        %v1210 = vadd.f32 %v996, %v1193
        %v1211 = vadd.f32 %v999, %v1196
        %v1212 = vadd.f32 %v1002, %v1199
        %v1213 = vadd.f32 %v1005, %v1202
        %v1214 = vadd.f32 %v1008, %v1205
        %s1215 = scalar_lea.vmem %s6, 12
        %v1216 = vld [vmem:[%s1215] sm:$0xf]
        %v1218 = vsel %vm734, %v596, 0
        %v1221 = vsel %vm734, %v600, 0
        %v1224 = vsel %vm734, %v604, 0
        %v1227 = vsel %vm734, %v608, 0
        %v1230 = vsel %vm734, %v612, 0
        %v1233 = vsel %vm734, %v616, 0
        %v1236 = vsel %vm734, %v620, 0
        %v1239 = vsel %vm734, %v624, 0
        %v1242 = vsel %vm759, %v1216, 0
        %1244 = vmatpush.msra.mxu0 0.0
        %1245 = vmatpush.msra.mxu0 0.0
        %1246 = vmatpush.msra.mxu0 0.0
        %1247 = vmatpush.msra.mxu0 0.0
        %1248 = vmatpush.msra.mxu0 0.0
        %1249 = vmatpush.msra.mxu0 0.0
        %1250 = vmatpush.msra.mxu0 0.0
        %1251 = vmatpush.msra.mxu0 0.0
        %1252 = vmatpush.msra.mxu0 0.0
        %1253 = vmatpush.msra.mxu0 0.0
        %1254 = vmatpush.msra.mxu0 0.0
        %1255 = vmatpush.msra.mxu0 0.0
        %1256 = vmatpush.msra.mxu0 0.0
        %1257 = vmatpush.msra.mxu0 0.0
        %1258 = vmatpush.msra.mxu0 0.0
        %1259 = vmatpush.msra.mxu0 %v1242
        %1260 = vmatmul.f32.gmra.mxu0 %v1218
        %v1261 = vpop.f32.mrf.mxu0
        %v1262 = vadd.f32 0.0, %v1261
        %1263 = vmatmul.f32.gmra.mxu0 %v1221
        %v1264 = vpop.f32.mrf.mxu0
        %v1265 = vadd.f32 0.0, %v1264
        %1266 = vmatmul.f32.gmra.mxu0 %v1224
        %v1267 = vpop.f32.mrf.mxu0
        %v1268 = vadd.f32 0.0, %v1267
        %1269 = vmatmul.f32.gmra.mxu0 %v1227
        %v1270 = vpop.f32.mrf.mxu0
        %v1271 = vadd.f32 0.0, %v1270
        %1272 = vmatmul.f32.gmra.mxu0 %v1230
        %v1273 = vpop.f32.mrf.mxu0
        %v1274 = vadd.f32 0.0, %v1273
        %1275 = vmatmul.f32.gmra.mxu0 %v1233
        %v1276 = vpop.f32.mrf.mxu0
        %v1277 = vadd.f32 0.0, %v1276
        %1278 = vmatmul.f32.gmra.mxu0 %v1236
        %v1279 = vpop.f32.mrf.mxu0
        %v1280 = vadd.f32 0.0, %v1279
        %1281 = vmatmul.f32.gmra.mxu0 %v1239
        %v1282 = vpop.f32.mrf.mxu0
        %v1283 = vadd.f32 0.0, %v1282
        %1284 = vdwg.mxu0
        %v1285 = vadd.f32 %v1137, %v1262
        %v1286 = vadd.f32 %v1138, %v1265
        %v1287 = vadd.f32 %v1139, %v1268
        %v1288 = vadd.f32 %v1140, %v1271
        %v1289 = vadd.f32 %v1141, %v1274
        %v1290 = vadd.f32 %v1142, %v1277
        %v1291 = vadd.f32 %v1143, %v1280
        %v1292 = vadd.f32 %v1144, %v1283
        %s1293 = scalar_lea.vmem %s8, 12
        %v1294 = vld [vmem:[%s1293] sm:$0xf]
        %v1296 = vsel %vm734, %v420, 0
        %v1299 = vsel %vm734, %v424, 0
        %v1302 = vsel %vm734, %v428, 0
        %v1305 = vsel %vm734, %v432, 0
        %v1308 = vsel %vm734, %v436, 0
        %v1311 = vsel %vm734, %v440, 0
        %v1314 = vsel %vm734, %v444, 0
        %v1317 = vsel %vm734, %v448, 0
        %v1320 = vsel %vm759, %v1294, 0
        %1322 = vmatpush.msra.mxu0 0.0
        %1323 = vmatpush.msra.mxu0 0.0
        %1324 = vmatpush.msra.mxu0 0.0
        %1325 = vmatpush.msra.mxu0 0.0
        %1326 = vmatpush.msra.mxu0 0.0
        %1327 = vmatpush.msra.mxu0 0.0
        %1328 = vmatpush.msra.mxu0 0.0
        %1329 = vmatpush.msra.mxu0 0.0
        %1330 = vmatpush.msra.mxu0 0.0
        %1331 = vmatpush.msra.mxu0 0.0
        %1332 = vmatpush.msra.mxu0 0.0
        %1333 = vmatpush.msra.mxu0 0.0
        %1334 = vmatpush.msra.mxu0 0.0
        %1335 = vmatpush.msra.mxu0 0.0
        %1336 = vmatpush.msra.mxu0 0.0
        %1337 = vmatpush.msra.mxu0 %v1320
        %1338 = vmatmul.f32.gmra.mxu0 %v1296
        %v1339 = vpop.f32.mrf.mxu0
        %v1340 = vadd.f32 0.0, %v1339
        %1341 = vmatmul.f32.gmra.mxu0 %v1299
        %v1342 = vpop.f32.mrf.mxu0
        %v1343 = vadd.f32 0.0, %v1342
        %1344 = vmatmul.f32.gmra.mxu0 %v1302
        %v1345 = vpop.f32.mrf.mxu0
        %v1346 = vadd.f32 0.0, %v1345
        %1347 = vmatmul.f32.gmra.mxu0 %v1305
        %v1348 = vpop.f32.mrf.mxu0
        %v1349 = vadd.f32 0.0, %v1348
        %1350 = vmatmul.f32.gmra.mxu0 %v1308
        %v1351 = vpop.f32.mrf.mxu0
        %v1352 = vadd.f32 0.0, %v1351
        %1353 = vmatmul.f32.gmra.mxu0 %v1311
        %v1354 = vpop.f32.mrf.mxu0
        %v1355 = vadd.f32 0.0, %v1354
        %1356 = vmatmul.f32.gmra.mxu0 %v1314
        %v1357 = vpop.f32.mrf.mxu0
        %v1358 = vadd.f32 0.0, %v1357
        %1359 = vmatmul.f32.gmra.mxu0 %v1317
        %v1360 = vpop.f32.mrf.mxu0
        %v1361 = vadd.f32 0.0, %v1360
        %1362 = vdwg.mxu0
        %v1363 = vadd.f32 %v1207, %v1340
        %v1364 = vadd.f32 %v1208, %v1343
        %v1365 = vadd.f32 %v1209, %v1346
        %v1366 = vadd.f32 %v1210, %v1349
        %v1367 = vadd.f32 %v1211, %v1352
        %v1368 = vadd.f32 %v1212, %v1355
        %v1369 = vadd.f32 %v1213, %v1358
        %v1370 = vadd.f32 %v1214, %v1361
        %s1371 = scalar_lea.vmem %s6, 16
        %v1372 = vld [vmem:[%s1371] sm:$0xf]
        %v1374 = vsel %vm734, %v714, 0
        %v1377 = vsel %vm734, %v716, 0
        %v1380 = vsel %vm734, %v718, 0
        %v1383 = vsel %vm734, %v720, 0
        %v1386 = vsel %vm734, %v722, 0
        %v1389 = vsel %vm734, %v724, 0
        %v1392 = vsel %vm734, %v726, 0
        %v1395 = vsel %vm734, %v728, 0
        %v1398 = vsel %vm759, %v1372, 0
        %1400 = vmatpush.msra.mxu0 0.0
        %1401 = vmatpush.msra.mxu0 0.0
        %1402 = vmatpush.msra.mxu0 0.0
        %1403 = vmatpush.msra.mxu0 0.0
        %1404 = vmatpush.msra.mxu0 0.0
        %1405 = vmatpush.msra.mxu0 0.0
        %1406 = vmatpush.msra.mxu0 0.0
        %1407 = vmatpush.msra.mxu0 0.0
        %1408 = vmatpush.msra.mxu0 0.0
        %1409 = vmatpush.msra.mxu0 0.0
        %1410 = vmatpush.msra.mxu0 0.0
        %1411 = vmatpush.msra.mxu0 0.0
        %1412 = vmatpush.msra.mxu0 0.0
        %1413 = vmatpush.msra.mxu0 0.0
        %1414 = vmatpush.msra.mxu0 0.0
        %1415 = vmatpush.msra.mxu0 %v1398
        %1416 = vmatmul.f32.gmra.mxu0 %v1374
        %v1417 = vpop.f32.mrf.mxu0
        %v1418 = vadd.f32 0.0, %v1417
        %1419 = vmatmul.f32.gmra.mxu0 %v1377
        %v1420 = vpop.f32.mrf.mxu0
        %v1421 = vadd.f32 0.0, %v1420
        %1422 = vmatmul.f32.gmra.mxu0 %v1380
        %v1423 = vpop.f32.mrf.mxu0
        %v1424 = vadd.f32 0.0, %v1423
        %1425 = vmatmul.f32.gmra.mxu0 %v1383
        %v1426 = vpop.f32.mrf.mxu0
        %v1427 = vadd.f32 0.0, %v1426
        %1428 = vmatmul.f32.gmra.mxu0 %v1386
        %v1429 = vpop.f32.mrf.mxu0
        %v1430 = vadd.f32 0.0, %v1429
        %1431 = vmatmul.f32.gmra.mxu0 %v1389
        %v1432 = vpop.f32.mrf.mxu0
        %v1433 = vadd.f32 0.0, %v1432
        %1434 = vmatmul.f32.gmra.mxu0 %v1392
        %v1435 = vpop.f32.mrf.mxu0
        %v1436 = vadd.f32 0.0, %v1435
        %1437 = vmatmul.f32.gmra.mxu0 %v1395
        %v1438 = vpop.f32.mrf.mxu0
        %v1439 = vadd.f32 0.0, %v1438
        %1440 = vdwg.mxu0
        %v1441 = vadd.f32 %v1285, %v1418
        %v1442 = vadd.f32 %v1286, %v1421
        %v1443 = vadd.f32 %v1287, %v1424
        %v1444 = vadd.f32 %v1288, %v1427
        %v1445 = vadd.f32 %v1289, %v1430
        %v1446 = vadd.f32 %v1290, %v1433
        %v1447 = vadd.f32 %v1291, %v1436
        %v1448 = vadd.f32 %v1292, %v1439
        %s1449 = scalar_lea.vmem %s8, 16
        %v1450 = vld [vmem:[%s1449] sm:$0xf]
        %v1452 = vsel %vm734, %v629, 0
        %v1455 = vsel %vm734, %v631, 0
        %v1458 = vsel %vm734, %v633, 0
        %v1461 = vsel %vm734, %v635, 0
        %v1464 = vsel %vm734, %v637, 0
        %v1467 = vsel %vm734, %v639, 0
        %v1470 = vsel %vm734, %v641, 0
        %v1473 = vsel %vm734, %v643, 0
        %v1476 = vsel %vm759, %v1450, 0
        %1478 = vmatpush.msra.mxu0 0.0
        %1479 = vmatpush.msra.mxu0 0.0
        %1480 = vmatpush.msra.mxu0 0.0
        %1481 = vmatpush.msra.mxu0 0.0
        %1482 = vmatpush.msra.mxu0 0.0
        %1483 = vmatpush.msra.mxu0 0.0
        %1484 = vmatpush.msra.mxu0 0.0
        %1485 = vmatpush.msra.mxu0 0.0
        %1486 = vmatpush.msra.mxu0 0.0
        %1487 = vmatpush.msra.mxu0 0.0
        %1488 = vmatpush.msra.mxu0 0.0
        %1489 = vmatpush.msra.mxu0 0.0
        %1490 = vmatpush.msra.mxu0 0.0
        %1491 = vmatpush.msra.mxu0 0.0
        %1492 = vmatpush.msra.mxu0 0.0
        %1493 = vmatpush.msra.mxu0 %v1476
        %1494 = vmatmul.f32.gmra.mxu0 %v1452
        %v1495 = vpop.f32.mrf.mxu0
        %v1496 = vadd.f32 0.0, %v1495
        %1497 = vmatmul.f32.gmra.mxu0 %v1455
        %v1498 = vpop.f32.mrf.mxu0
        %v1499 = vadd.f32 0.0, %v1498
        %1500 = vmatmul.f32.gmra.mxu0 %v1458
        %v1501 = vpop.f32.mrf.mxu0
        %v1502 = vadd.f32 0.0, %v1501
        %1503 = vmatmul.f32.gmra.mxu0 %v1461
        %v1504 = vpop.f32.mrf.mxu0
        %v1505 = vadd.f32 0.0, %v1504
        %1506 = vmatmul.f32.gmra.mxu0 %v1464
        %v1507 = vpop.f32.mrf.mxu0
        %v1508 = vadd.f32 0.0, %v1507
        %1509 = vmatmul.f32.gmra.mxu0 %v1467
        %v1510 = vpop.f32.mrf.mxu0
        %v1511 = vadd.f32 0.0, %v1510
        %1512 = vmatmul.f32.gmra.mxu0 %v1470
        %v1513 = vpop.f32.mrf.mxu0
        %v1514 = vadd.f32 0.0, %v1513
        %1515 = vmatmul.f32.gmra.mxu0 %v1473
        %v1516 = vpop.f32.mrf.mxu0
        %v1517 = vadd.f32 0.0, %v1516
        %1518 = vdwg.mxu0
        %v1519 = vadd.f32 %v1363, %v1496
        %v1520 = vadd.f32 %v1364, %v1499
        %v1521 = vadd.f32 %v1365, %v1502
        %v1522 = vadd.f32 %v1366, %v1505
        %v1523 = vadd.f32 %v1367, %v1508
        %v1524 = vadd.f32 %v1368, %v1511
        %v1525 = vadd.f32 %v1369, %v1514
        %v1526 = vadd.f32 %v1370, %v1517
        %v1535 = vrot.slane %v596, 1
        %v1536 = vrot.slane %v597, 1
        %v1537 = vsel %vm1018, %v1535, %v1536
        %v1538 = vrot.slane %v600, 1
        %v1539 = vrot.slane %v601, 1
        %v1540 = vsel %vm1018, %v1538, %v1539
        %v1541 = vrot.slane %v604, 1
        %v1542 = vrot.slane %v605, 1
        %v1543 = vsel %vm1018, %v1541, %v1542
        %v1544 = vrot.slane %v608, 1
        %v1545 = vrot.slane %v609, 1
        %v1546 = vsel %vm1018, %v1544, %v1545
        %v1547 = vrot.slane %v612, 1
        %v1548 = vrot.slane %v613, 1
        %v1549 = vsel %vm1018, %v1547, %v1548
        %v1550 = vrot.slane %v616, 1
        %v1551 = vrot.slane %v617, 1
        %v1552 = vsel %vm1018, %v1550, %v1551
        %v1553 = vrot.slane %v620, 1
        %v1554 = vrot.slane %v621, 1
        %v1555 = vsel %vm1018, %v1553, %v1554
        %v1556 = vrot.slane %v624, 1
        %v1557 = vrot.slane %v625, 1
        %v1558 = vsel %vm1018, %v1556, %v1557
        %v1567 = vrot.slane %v420, 1
        %v1568 = vrot.slane %v421, 1
        %v1569 = vsel %vm1018, %v1567, %v1568
        %v1570 = vrot.slane %v424, 1
        %v1571 = vrot.slane %v425, 1
        %v1572 = vsel %vm1018, %v1570, %v1571
        %v1573 = vrot.slane %v428, 1
        %v1574 = vrot.slane %v429, 1
        %v1575 = vsel %vm1018, %v1573, %v1574
        %v1576 = vrot.slane %v432, 1
        %v1577 = vrot.slane %v433, 1
        %v1578 = vsel %vm1018, %v1576, %v1577
        %v1579 = vrot.slane %v436, 1
        %v1580 = vrot.slane %v437, 1
        %v1581 = vsel %vm1018, %v1579, %v1580
        %v1582 = vrot.slane %v440, 1
        %v1583 = vrot.slane %v441, 1
        %v1584 = vsel %vm1018, %v1582, %v1583
        %v1585 = vrot.slane %v444, 1
        %v1586 = vrot.slane %v445, 1
        %v1587 = vsel %vm1018, %v1585, %v1586
        %v1588 = vrot.slane %v448, 1
        %v1589 = vrot.slane %v449, 1
        %v1590 = vsel %vm1018, %v1588, %v1589
        %s1591 = scalar_lea.vmem %s6, 20
        %v1592 = vld [vmem:[%s1591] sm:$0xf]
        %v1593 = vsel %vm734, %v1537, 0
        %v1595 = vsel %vm734, %v1540, 0
        %v1597 = vsel %vm734, %v1543, 0
        %v1599 = vsel %vm734, %v1546, 0
        %v1601 = vsel %vm734, %v1549, 0
        %v1603 = vsel %vm734, %v1552, 0
        %v1605 = vsel %vm734, %v1555, 0
        %v1607 = vsel %vm734, %v1558, 0
        %v1610 = vsel %vm759, %v1592, 0
        %1612 = vmatpush.msra.mxu0 0.0
        %1613 = vmatpush.msra.mxu0 0.0
        %1614 = vmatpush.msra.mxu0 0.0
        %1615 = vmatpush.msra.mxu0 0.0
        %1616 = vmatpush.msra.mxu0 0.0
        %1617 = vmatpush.msra.mxu0 0.0
        %1618 = vmatpush.msra.mxu0 0.0
        %1619 = vmatpush.msra.mxu0 0.0
        %1620 = vmatpush.msra.mxu0 0.0
        %1621 = vmatpush.msra.mxu0 0.0
        %1622 = vmatpush.msra.mxu0 0.0
        %1623 = vmatpush.msra.mxu0 0.0
        %1624 = vmatpush.msra.mxu0 0.0
        %1625 = vmatpush.msra.mxu0 0.0
        %1626 = vmatpush.msra.mxu0 0.0
        %1627 = vmatpush.msra.mxu0 %v1610
        %1628 = vmatmul.f32.gmra.mxu0 %v1593
        %v1629 = vpop.f32.mrf.mxu0
        %v1630 = vadd.f32 0.0, %v1629
        %1631 = vmatmul.f32.gmra.mxu0 %v1595
        %v1632 = vpop.f32.mrf.mxu0
        %v1633 = vadd.f32 0.0, %v1632
        %1634 = vmatmul.f32.gmra.mxu0 %v1597
        %v1635 = vpop.f32.mrf.mxu0
        %v1636 = vadd.f32 0.0, %v1635
        %1637 = vmatmul.f32.gmra.mxu0 %v1599
        %v1638 = vpop.f32.mrf.mxu0
        %v1639 = vadd.f32 0.0, %v1638
        %1640 = vmatmul.f32.gmra.mxu0 %v1601
        %v1641 = vpop.f32.mrf.mxu0
        %v1642 = vadd.f32 0.0, %v1641
        %1643 = vmatmul.f32.gmra.mxu0 %v1603
        %v1644 = vpop.f32.mrf.mxu0
        %v1645 = vadd.f32 0.0, %v1644
        %1646 = vmatmul.f32.gmra.mxu0 %v1605
        %v1647 = vpop.f32.mrf.mxu0
        %v1648 = vadd.f32 0.0, %v1647
        %1649 = vmatmul.f32.gmra.mxu0 %v1607
        %v1650 = vpop.f32.mrf.mxu0
        %v1651 = vadd.f32 0.0, %v1650
        %1652 = vdwg.mxu0
        %v1653 = vadd.f32 %v1441, %v1630
        %v1654 = vadd.f32 %v1442, %v1633
        %v1655 = vadd.f32 %v1443, %v1636
        %v1656 = vadd.f32 %v1444, %v1639
        %v1657 = vadd.f32 %v1445, %v1642
        %v1658 = vadd.f32 %v1446, %v1645
        %v1659 = vadd.f32 %v1447, %v1648
        %v1660 = vadd.f32 %v1448, %v1651
        %s1661 = scalar_lea.vmem %s8, 20
        %v1662 = vld [vmem:[%s1661] sm:$0xf]
        %v1663 = vsel %vm734, %v1569, 0
        %v1665 = vsel %vm734, %v1572, 0
        %v1667 = vsel %vm734, %v1575, 0
        %v1669 = vsel %vm734, %v1578, 0
        %v1671 = vsel %vm734, %v1581, 0
        %v1673 = vsel %vm734, %v1584, 0
        %v1675 = vsel %vm734, %v1587, 0
        %v1677 = vsel %vm734, %v1590, 0
        %v1680 = vsel %vm759, %v1662, 0
        %1682 = vmatpush.msra.mxu0 0.0
        %1683 = vmatpush.msra.mxu0 0.0
        %1684 = vmatpush.msra.mxu0 0.0
        %1685 = vmatpush.msra.mxu0 0.0
        %1686 = vmatpush.msra.mxu0 0.0
        %1687 = vmatpush.msra.mxu0 0.0
        %1688 = vmatpush.msra.mxu0 0.0
        %1689 = vmatpush.msra.mxu0 0.0
        %1690 = vmatpush.msra.mxu0 0.0
        %1691 = vmatpush.msra.mxu0 0.0
        %1692 = vmatpush.msra.mxu0 0.0
        %1693 = vmatpush.msra.mxu0 0.0
        %1694 = vmatpush.msra.mxu0 0.0
        %1695 = vmatpush.msra.mxu0 0.0
        %1696 = vmatpush.msra.mxu0 0.0
        %1697 = vmatpush.msra.mxu0 %v1680
        %1698 = vmatmul.f32.gmra.mxu0 %v1663
        %v1699 = vpop.f32.mrf.mxu0
        %v1700 = vadd.f32 0.0, %v1699
        %1701 = vmatmul.f32.gmra.mxu0 %v1665
        %v1702 = vpop.f32.mrf.mxu0
        %v1703 = vadd.f32 0.0, %v1702
        %1704 = vmatmul.f32.gmra.mxu0 %v1667
        %v1705 = vpop.f32.mrf.mxu0
        %v1706 = vadd.f32 0.0, %v1705
        %1707 = vmatmul.f32.gmra.mxu0 %v1669
        %v1708 = vpop.f32.mrf.mxu0
        %v1709 = vadd.f32 0.0, %v1708
        %1710 = vmatmul.f32.gmra.mxu0 %v1671
        %v1711 = vpop.f32.mrf.mxu0
        %v1712 = vadd.f32 0.0, %v1711
        %1713 = vmatmul.f32.gmra.mxu0 %v1673
        %v1714 = vpop.f32.mrf.mxu0
        %v1715 = vadd.f32 0.0, %v1714
        %1716 = vmatmul.f32.gmra.mxu0 %v1675
        %v1717 = vpop.f32.mrf.mxu0
        %v1718 = vadd.f32 0.0, %v1717
        %1719 = vmatmul.f32.gmra.mxu0 %v1677
        %v1720 = vpop.f32.mrf.mxu0
        %v1721 = vadd.f32 0.0, %v1720
        %1722 = vdwg.mxu0
        %v1723 = vadd.f32 %v1519, %v1700
        %v1724 = vadd.f32 %v1520, %v1703
        %v1725 = vadd.f32 %v1521, %v1706
        %v1726 = vadd.f32 %v1522, %v1709
        %v1727 = vadd.f32 %v1523, %v1712
        %v1728 = vadd.f32 %v1524, %v1715
        %v1729 = vadd.f32 %v1525, %v1718
        %v1730 = vadd.f32 %v1526, %v1721
        %s1731 = scalar_lea.vmem %s6, 24
        %v1732 = vld [vmem:[%s1731] sm:$0xf]
        %v1734 = vsel %vm734, %v626, 0
        %v1737 = vsel %vm759, %v1732, 0
        %1739 = vmatpush.msra.mxu0 0.0
        %1740 = vmatpush.msra.mxu0 0.0
        %1741 = vmatpush.msra.mxu0 0.0
        %1742 = vmatpush.msra.mxu0 0.0
        %1743 = vmatpush.msra.mxu0 0.0
        %1744 = vmatpush.msra.mxu0 0.0
        %1745 = vmatpush.msra.mxu0 0.0
        %1746 = vmatpush.msra.mxu0 0.0
        %1747 = vmatpush.msra.mxu0 0.0
        %1748 = vmatpush.msra.mxu0 0.0
        %1749 = vmatpush.msra.mxu0 0.0
        %1750 = vmatpush.msra.mxu0 0.0
        %1751 = vmatpush.msra.mxu0 0.0
        %1752 = vmatpush.msra.mxu0 0.0
        %1753 = vmatpush.msra.mxu0 0.0
        %1754 = vmatpush.msra.mxu0 %v1737
        %1755 = vmatmul.f32.gmra.mxu0 %v808
        %v1756 = vpop.f32.mrf.mxu0
        %v1757 = vadd.f32 0.0, %v1756
        %1758 = vmatmul.f32.gmra.mxu0 %v811
        %v1759 = vpop.f32.mrf.mxu0
        %v1760 = vadd.f32 0.0, %v1759
        %1761 = vmatmul.f32.gmra.mxu0 %v814
        %v1762 = vpop.f32.mrf.mxu0
        %v1763 = vadd.f32 0.0, %v1762
        %1764 = vmatmul.f32.gmra.mxu0 %v817
        %v1765 = vpop.f32.mrf.mxu0
        %v1766 = vadd.f32 0.0, %v1765
        %1767 = vmatmul.f32.gmra.mxu0 %v820
        %v1768 = vpop.f32.mrf.mxu0
        %v1769 = vadd.f32 0.0, %v1768
        %1770 = vmatmul.f32.gmra.mxu0 %v823
        %v1771 = vpop.f32.mrf.mxu0
        %v1772 = vadd.f32 0.0, %v1771
        %1773 = vmatmul.f32.gmra.mxu0 %v826
        %v1774 = vpop.f32.mrf.mxu0
        %v1775 = vadd.f32 0.0, %v1774
        %1776 = vmatmul.f32.gmra.mxu0 %v1734
        %v1777 = vpop.f32.mrf.mxu0
        %v1778 = vadd.f32 0.0, %v1777
        %1779 = vdwg.mxu0
        %v1780 = vadd.f32 %v1653, %v1757
        %v1781 = vadd.f32 %v1654, %v1760
        %v1782 = vadd.f32 %v1655, %v1763
        %v1783 = vadd.f32 %v1656, %v1766
        %v1784 = vadd.f32 %v1657, %v1769
        %v1785 = vadd.f32 %v1658, %v1772
        %v1786 = vadd.f32 %v1659, %v1775
        %v1787 = vadd.f32 %v1660, %v1778
        %s1788 = scalar_lea.vmem %s8, 24
        %v1789 = vld [vmem:[%s1788] sm:$0xf]
        %v1791 = vsel %vm734, %v450, 0
        %v1794 = vsel %vm759, %v1789, 0
        %1796 = vmatpush.msra.mxu0 0.0
        %1797 = vmatpush.msra.mxu0 0.0
        %1798 = vmatpush.msra.mxu0 0.0
        %1799 = vmatpush.msra.mxu0 0.0
        %1800 = vmatpush.msra.mxu0 0.0
        %1801 = vmatpush.msra.mxu0 0.0
        %1802 = vmatpush.msra.mxu0 0.0
        %1803 = vmatpush.msra.mxu0 0.0
        %1804 = vmatpush.msra.mxu0 0.0
        %1805 = vmatpush.msra.mxu0 0.0
        %1806 = vmatpush.msra.mxu0 0.0
        %1807 = vmatpush.msra.mxu0 0.0
        %1808 = vmatpush.msra.mxu0 0.0
        %1809 = vmatpush.msra.mxu0 0.0
        %1810 = vmatpush.msra.mxu0 0.0
        %1811 = vmatpush.msra.mxu0 %v1794
        %1812 = vmatmul.f32.gmra.mxu0 %v946
        %v1813 = vpop.f32.mrf.mxu0
        %v1814 = vadd.f32 0.0, %v1813
        %1815 = vmatmul.f32.gmra.mxu0 %v949
        %v1816 = vpop.f32.mrf.mxu0
        %v1817 = vadd.f32 0.0, %v1816
        %1818 = vmatmul.f32.gmra.mxu0 %v952
        %v1819 = vpop.f32.mrf.mxu0
        %v1820 = vadd.f32 0.0, %v1819
        %1821 = vmatmul.f32.gmra.mxu0 %v955
        %v1822 = vpop.f32.mrf.mxu0
        %v1823 = vadd.f32 0.0, %v1822
        %1824 = vmatmul.f32.gmra.mxu0 %v958
        %v1825 = vpop.f32.mrf.mxu0
        %v1826 = vadd.f32 0.0, %v1825
        %1827 = vmatmul.f32.gmra.mxu0 %v961
        %v1828 = vpop.f32.mrf.mxu0
        %v1829 = vadd.f32 0.0, %v1828
        %1830 = vmatmul.f32.gmra.mxu0 %v964
        %v1831 = vpop.f32.mrf.mxu0
        %v1832 = vadd.f32 0.0, %v1831
        %1833 = vmatmul.f32.gmra.mxu0 %v1791
        %v1834 = vpop.f32.mrf.mxu0
        %v1835 = vadd.f32 0.0, %v1834
        %1836 = vdwg.mxu0
        %v1837 = vadd.f32 %v1723, %v1814
        %v1838 = vadd.f32 %v1724, %v1817
        %v1839 = vadd.f32 %v1725, %v1820
        %v1840 = vadd.f32 %v1726, %v1823
        %v1841 = vadd.f32 %v1727, %v1826
        %v1842 = vadd.f32 %v1728, %v1829
        %v1843 = vadd.f32 %v1729, %v1832
        %v1844 = vadd.f32 %v1730, %v1835
        %s1845 = scalar_lea.vmem %s6, 28
        %v1846 = vld [vmem:[%s1845] sm:$0xf]
        %v1848 = vsel %vm734, %v729, 0
        %v1851 = vsel %vm759, %v1846, 0
        %1853 = vmatpush.msra.mxu0 0.0
        %1854 = vmatpush.msra.mxu0 0.0
        %1855 = vmatpush.msra.mxu0 0.0
        %1856 = vmatpush.msra.mxu0 0.0
        %1857 = vmatpush.msra.mxu0 0.0
        %1858 = vmatpush.msra.mxu0 0.0
        %1859 = vmatpush.msra.mxu0 0.0
        %1860 = vmatpush.msra.mxu0 0.0
        %1861 = vmatpush.msra.mxu0 0.0
        %1862 = vmatpush.msra.mxu0 0.0
        %1863 = vmatpush.msra.mxu0 0.0
        %1864 = vmatpush.msra.mxu0 0.0
        %1865 = vmatpush.msra.mxu0 0.0
        %1866 = vmatpush.msra.mxu0 0.0
        %1867 = vmatpush.msra.mxu0 0.0
        %1868 = vmatpush.msra.mxu0 %v1851
        %1869 = vmatmul.f32.gmra.mxu0 %v739
        %v1870 = vpop.f32.mrf.mxu0
        %v1871 = vadd.f32 0.0, %v1870
        %1872 = vmatmul.f32.gmra.mxu0 %v742
        %v1873 = vpop.f32.mrf.mxu0
        %v1874 = vadd.f32 0.0, %v1873
        %1875 = vmatmul.f32.gmra.mxu0 %v745
        %v1876 = vpop.f32.mrf.mxu0
        %v1877 = vadd.f32 0.0, %v1876
        %1878 = vmatmul.f32.gmra.mxu0 %v748
        %v1879 = vpop.f32.mrf.mxu0
        %v1880 = vadd.f32 0.0, %v1879
        %1881 = vmatmul.f32.gmra.mxu0 %v751
        %v1882 = vpop.f32.mrf.mxu0
        %v1883 = vadd.f32 0.0, %v1882
        %1884 = vmatmul.f32.gmra.mxu0 %v754
        %v1885 = vpop.f32.mrf.mxu0
        %v1886 = vadd.f32 0.0, %v1885
        %1887 = vmatmul.f32.gmra.mxu0 %v757
        %v1888 = vpop.f32.mrf.mxu0
        %v1889 = vadd.f32 0.0, %v1888
        %1890 = vmatmul.f32.gmra.mxu0 %v1848
        %v1891 = vpop.f32.mrf.mxu0
        %v1892 = vadd.f32 0.0, %v1891
        %1893 = vdwg.mxu0
        %v1894 = vadd.f32 %v1780, %v1871
        %v1895 = vadd.f32 %v1781, %v1874
        %v1896 = vadd.f32 %v1782, %v1877
        %v1897 = vadd.f32 %v1783, %v1880
        %v1898 = vadd.f32 %v1784, %v1883
        %v1899 = vadd.f32 %v1785, %v1886
        %v1900 = vadd.f32 %v1786, %v1889
        %v1901 = vadd.f32 %v1787, %v1892
        %s1902 = scalar_lea.vmem %s8, 28
        %v1903 = vld [vmem:[%s1902] sm:$0xf]
        %v1905 = vsel %vm734, %v644, 0
        %v1908 = vsel %vm759, %v1903, 0
        %1910 = vmatpush.msra.mxu0 0.0
        %1911 = vmatpush.msra.mxu0 0.0
        %1912 = vmatpush.msra.mxu0 0.0
        %1913 = vmatpush.msra.mxu0 0.0
        %1914 = vmatpush.msra.mxu0 0.0
        %1915 = vmatpush.msra.mxu0 0.0
        %1916 = vmatpush.msra.mxu0 0.0
        %1917 = vmatpush.msra.mxu0 0.0
        %1918 = vmatpush.msra.mxu0 0.0
        %1919 = vmatpush.msra.mxu0 0.0
        %1920 = vmatpush.msra.mxu0 0.0
        %1921 = vmatpush.msra.mxu0 0.0
        %1922 = vmatpush.msra.mxu0 0.0
        %1923 = vmatpush.msra.mxu0 0.0
        %1924 = vmatpush.msra.mxu0 0.0
        %1925 = vmatpush.msra.mxu0 %v1908
        %1926 = vmatmul.f32.gmra.mxu0 %v878
        %v1927 = vpop.f32.mrf.mxu0
        %v1928 = vadd.f32 0.0, %v1927
        %1929 = vmatmul.f32.gmra.mxu0 %v881
        %v1930 = vpop.f32.mrf.mxu0
        %v1931 = vadd.f32 0.0, %v1930
        %1932 = vmatmul.f32.gmra.mxu0 %v884
        %v1933 = vpop.f32.mrf.mxu0
        %v1934 = vadd.f32 0.0, %v1933
        %1935 = vmatmul.f32.gmra.mxu0 %v887
        %v1936 = vpop.f32.mrf.mxu0
        %v1937 = vadd.f32 0.0, %v1936
        %1938 = vmatmul.f32.gmra.mxu0 %v890
        %v1939 = vpop.f32.mrf.mxu0
        %v1940 = vadd.f32 0.0, %v1939
        %1941 = vmatmul.f32.gmra.mxu0 %v893
        %v1942 = vpop.f32.mrf.mxu0
        %v1943 = vadd.f32 0.0, %v1942
        %1944 = vmatmul.f32.gmra.mxu0 %v896
        %v1945 = vpop.f32.mrf.mxu0
        %v1946 = vadd.f32 0.0, %v1945
        %1947 = vmatmul.f32.gmra.mxu0 %v1905
        %v1948 = vpop.f32.mrf.mxu0
        %v1949 = vadd.f32 0.0, %v1948
        %1950 = vdwg.mxu0
        %v1951 = vadd.f32 %v1837, %v1928
        %v1952 = vadd.f32 %v1838, %v1931
        %v1953 = vadd.f32 %v1839, %v1934
        %v1954 = vadd.f32 %v1840, %v1937
        %v1955 = vadd.f32 %v1841, %v1940
        %v1956 = vadd.f32 %v1842, %v1943
        %v1957 = vadd.f32 %v1843, %v1946
        %v1958 = vadd.f32 %v1844, %v1949
        %v1960 = vrot.slane %v626, 1
        %v1961 = vrot.slane %v627, 1
        %v1962 = vsel %vm1018, %v1960, %v1961
        %v1964 = vrot.slane %v450, 1
        %v1965 = vrot.slane %v451, 1
        %v1966 = vsel %vm1018, %v1964, %v1965
        %s1967 = scalar_lea.vmem %s6, 32
        %v1968 = vld [vmem:[%s1967] sm:$0xf]
        %v1969 = vsel %vm734, %v1962, 0
        %v1972 = vsel %vm759, %v1968, 0
        %1974 = vmatpush.msra.mxu0 0.0
        %1975 = vmatpush.msra.mxu0 0.0
        %1976 = vmatpush.msra.mxu0 0.0
        %1977 = vmatpush.msra.mxu0 0.0
        %1978 = vmatpush.msra.mxu0 0.0
        %1979 = vmatpush.msra.mxu0 0.0
        %1980 = vmatpush.msra.mxu0 0.0
        %1981 = vmatpush.msra.mxu0 0.0
        %1982 = vmatpush.msra.mxu0 0.0
        %1983 = vmatpush.msra.mxu0 0.0
        %1984 = vmatpush.msra.mxu0 0.0
        %1985 = vmatpush.msra.mxu0 0.0
        %1986 = vmatpush.msra.mxu0 0.0
        %1987 = vmatpush.msra.mxu0 0.0
        %1988 = vmatpush.msra.mxu0 0.0
        %1989 = vmatpush.msra.mxu0 %v1972
        %1990 = vmatmul.f32.gmra.mxu0 %v1079
        %v1991 = vpop.f32.mrf.mxu0
        %v1992 = vadd.f32 0.0, %v1991
        %1993 = vmatmul.f32.gmra.mxu0 %v1081
        %v1994 = vpop.f32.mrf.mxu0
        %v1995 = vadd.f32 0.0, %v1994
        %1996 = vmatmul.f32.gmra.mxu0 %v1083
        %v1997 = vpop.f32.mrf.mxu0
        %v1998 = vadd.f32 0.0, %v1997
        %1999 = vmatmul.f32.gmra.mxu0 %v1085
        %v2000 = vpop.f32.mrf.mxu0
        %v2001 = vadd.f32 0.0, %v2000
        %2002 = vmatmul.f32.gmra.mxu0 %v1087
        %v2003 = vpop.f32.mrf.mxu0
        %v2004 = vadd.f32 0.0, %v2003
        %2005 = vmatmul.f32.gmra.mxu0 %v1089
        %v2006 = vpop.f32.mrf.mxu0
        %v2007 = vadd.f32 0.0, %v2006
        %2008 = vmatmul.f32.gmra.mxu0 %v1091
        %v2009 = vpop.f32.mrf.mxu0
        %v2010 = vadd.f32 0.0, %v2009
        %2011 = vmatmul.f32.gmra.mxu0 %v1969
        %v2012 = vpop.f32.mrf.mxu0
        %v2013 = vadd.f32 0.0, %v2012
        %2014 = vdwg.mxu0
        %v2015 = vadd.f32 %v1894, %v1992
        %v2016 = vadd.f32 %v1895, %v1995
        %v2017 = vadd.f32 %v1896, %v1998
        %v2018 = vadd.f32 %v1897, %v2001
        %v2019 = vadd.f32 %v1898, %v2004
        %v2020 = vadd.f32 %v1899, %v2007
        %v2021 = vadd.f32 %v1900, %v2010
        %v2022 = vadd.f32 %v1901, %v2013
        %s2023 = scalar_lea.vmem %s8, 32
        %v2024 = vld [vmem:[%s2023] sm:$0xf]
        %v2025 = vsel %vm734, %v1966, 0
        %v2028 = vsel %vm759, %v2024, 0
        %2030 = vmatpush.msra.mxu0 0.0
        %2031 = vmatpush.msra.mxu0 0.0
        %2032 = vmatpush.msra.mxu0 0.0
        %2033 = vmatpush.msra.mxu0 0.0
        %2034 = vmatpush.msra.mxu0 0.0
        %2035 = vmatpush.msra.mxu0 0.0
        %2036 = vmatpush.msra.mxu0 0.0
        %2037 = vmatpush.msra.mxu0 0.0
        %2038 = vmatpush.msra.mxu0 0.0
        %2039 = vmatpush.msra.mxu0 0.0
        %2040 = vmatpush.msra.mxu0 0.0
        %2041 = vmatpush.msra.mxu0 0.0
        %2042 = vmatpush.msra.mxu0 0.0
        %2043 = vmatpush.msra.mxu0 0.0
        %2044 = vmatpush.msra.mxu0 0.0
        %2045 = vmatpush.msra.mxu0 %v2028
        %2046 = vmatmul.f32.gmra.mxu0 %v1149
        %v2047 = vpop.f32.mrf.mxu0
        %v2048 = vadd.f32 0.0, %v2047
        %2049 = vmatmul.f32.gmra.mxu0 %v1151
        %v2050 = vpop.f32.mrf.mxu0
        %v2051 = vadd.f32 0.0, %v2050
        %2052 = vmatmul.f32.gmra.mxu0 %v1153
        %v2053 = vpop.f32.mrf.mxu0
        %v2054 = vadd.f32 0.0, %v2053
        %2055 = vmatmul.f32.gmra.mxu0 %v1155
        %v2056 = vpop.f32.mrf.mxu0
        %v2057 = vadd.f32 0.0, %v2056
        %2058 = vmatmul.f32.gmra.mxu0 %v1157
        %v2059 = vpop.f32.mrf.mxu0
        %v2060 = vadd.f32 0.0, %v2059
        %2061 = vmatmul.f32.gmra.mxu0 %v1159
        %v2062 = vpop.f32.mrf.mxu0
        %v2063 = vadd.f32 0.0, %v2062
        %2064 = vmatmul.f32.gmra.mxu0 %v1161
        %v2065 = vpop.f32.mrf.mxu0
        %v2066 = vadd.f32 0.0, %v2065
        %2067 = vmatmul.f32.gmra.mxu0 %v2025
        %v2068 = vpop.f32.mrf.mxu0
        %v2069 = vadd.f32 0.0, %v2068
        %2070 = vdwg.mxu0
        %v2071 = vadd.f32 %v1951, %v2048
        %v2072 = vadd.f32 %v1952, %v2051
        %v2073 = vadd.f32 %v1953, %v2054
        %v2074 = vadd.f32 %v1954, %v2057
        %v2075 = vadd.f32 %v1955, %v2060
        %v2076 = vadd.f32 %v1956, %v2063
        %v2077 = vadd.f32 %v1957, %v2066
        %v2078 = vadd.f32 %v1958, %v2069
        %v2079 = vld [vmem:[%s7] sm:$0x1]
        %v2081 = vperm.slane %v2079, 0
        %v2083 = vadd.f32 %v2015, %v2081
        %v2084 = vadd.f32 %v2016, %v2081
        %v2085 = vadd.f32 %v2017, %v2081
        %v2086 = vadd.f32 %v2018, %v2081
        %v2087 = vadd.f32 %v2019, %v2081
        %v2088 = vadd.f32 %v2020, %v2081
        %v2089 = vadd.f32 %v2021, %v2081
        %v2090 = vadd.f32 %v2022, %v2081
        %vm2091 = vcmask 64512
        %2092 = vst.msk [vmem:[%s398] sm:$0xff] %vm2091, %v2083
        %2093 = vst.msk [vmem:[%s398 + $0x8] sm:$0xff] %vm2091, %v2084
        %2094 = vst.msk [vmem:[%s398 + $0x10] sm:$0xff] %vm2091, %v2085
        %2095 = vst.msk [vmem:[%s398 + $0x18] sm:$0xff] %vm2091, %v2086
        %2096 = vst.msk [vmem:[%s398 + $0x20] sm:$0xff] %vm2091, %v2087
        %2097 = vst.msk [vmem:[%s398 + $0x28] sm:$0xff] %vm2091, %v2088
        %2098 = vst.msk [vmem:[%s398 + $0x30] sm:$0xff] %vm2091, %v2089
        %2099 = vst.msk [vmem:[%s398 + $0x38] sm:$0xff] %vm2091, %v2090
        %v2100 = vld [vmem:[%s9] sm:$0x1]
        %v2102 = vperm.slane %v2100, 0
        %v2104 = vadd.f32 %v2071, %v2102
        %v2105 = vadd.f32 %v2072, %v2102
        %v2106 = vadd.f32 %v2073, %v2102
        %v2107 = vadd.f32 %v2074, %v2102
        %v2108 = vadd.f32 %v2075, %v2102
        %v2109 = vadd.f32 %v2076, %v2102
        %v2110 = vadd.f32 %v2077, %v2102
        %v2111 = vadd.f32 %v2078, %v2102
        %2112 = vst.msk [vmem:[%s405] sm:$0xff] %vm2091, %v2104
        %2113 = vst.msk [vmem:[%s405 + $0x8] sm:$0xff] %vm2091, %v2105
        %2114 = vst.msk [vmem:[%s405 + $0x10] sm:$0xff] %vm2091, %v2106
        %2115 = vst.msk [vmem:[%s405 + $0x18] sm:$0xff] %vm2091, %v2107
        %2116 = vst.msk [vmem:[%s405 + $0x20] sm:$0xff] %vm2091, %v2108
        %2117 = vst.msk [vmem:[%s405 + $0x28] sm:$0xff] %vm2091, %v2109
        %2118 = vst.msk [vmem:[%s405 + $0x30] sm:$0xff] %vm2091, %v2110
        %2119 = vst.msk [vmem:[%s405 + $0x38] sm:$0xff] %vm2091, %v2111
        %s2120 = sand.u32 %s257, 1
        %s2121 = scalar_lea.sflag [#allocation3], %s2120
        %s2122 = sand.u32 %s257, 1
        %s2123 = smul.addr %s2122, 64
        %s2124 = scalar_lea.vmem [#allocation2], %s2123
        %s2125 = sand.u32 %s283, 1
        %s2126 = scalar_lea.sflag [#allocation5], %s2125
        %s2127 = sand.u32 %s283, 1
        %s2128 = smul.addr %s2127, 64
        %s2129 = scalar_lea.vmem [#allocation4], %s2128
        // Predicated region
        $region61: #{tpu_custom_call.1} parent=59 // pred_check
          %p2130 = pneg %p267
        $region62: #{tpu_custom_call.1} parent=59 // pred_check_branch
          %2132 = sbr.rel (%p2130) target = $region64
        $region63: #{tpu_custom_call.1} parent=59 // pred_region
          %2134 = vsyncadd %s2121, 0
          %s2135 = smul.addr %s29, 8
          %s2136 = smul.addr %s2135, 8
          %s2137 = scalar_lea.hbm %s10, %s2136
          %s2138 = sshll.u32 %s2124, 4
          %s2139 = int_to_ptr.vmem [resolvable:$true] %s2138
          %s2140 = sshll.u32 %s2137, 4
          %s2141 = int_to_ptr.hbm [resolvable:$true] %s2140
          %2146 = dma.vmem_to_hbm [thread:$0]  %s2139, 1024, %s2141, %s2121, 128, 128, 8
        $region64: #{tpu_custom_call.1} parent=59 // pred_fallthru
          _
        // Predicated region
        $region65: #{tpu_custom_call.1} parent=59 // pred_check
          %p2147 = pneg %p293
        $region66: #{tpu_custom_call.1} parent=59 // pred_check_branch
          %2149 = sbr.rel (%p2147) target = $region68
        $region67: #{tpu_custom_call.1} parent=59 // pred_region
          %2151 = vsyncadd %s2126, 0
          %s2152 = smul.addr %s29, 8
          %s2153 = smul.addr %s2152, 8
          %s2154 = scalar_lea.hbm %s11, %s2153
          %s2155 = sshll.u32 %s2129, 4
          %s2156 = int_to_ptr.vmem [resolvable:$true] %s2155
          %s2157 = sshll.u32 %s2154, 4
          %s2158 = int_to_ptr.hbm [resolvable:$true] %s2157
          %2163 = dma.vmem_to_hbm [thread:$0]  %s2156, 1024, %s2158, %s2126, 128, 128, 8
        $region68: #{tpu_custom_call.1} parent=59 // pred_fallthru
          _
      $region60: #{tpu_custom_call.1} parent=5 // pred_fallthru
        _
      %p2164 = scmp.le.s32.totalorder 2, %s24
      // Predicated region
      $region69: #{tpu_custom_call.1} parent=5 // pred_check
        %p2165 = pneg %p2164
      $region70: #{tpu_custom_call.1} parent=5 // pred_check_branch
        %2167 = sbr.rel (%p2165) target = $region72
      $region71: #{tpu_custom_call.1} parent=5 // pred_region
        %s2168 = ssub.s32 %s24, 2
        // Predicated region
        $region73: #{tpu_custom_call.1} parent=71 // pred_check
          %p2169 = pneg %p273
        $region74: #{tpu_custom_call.1} parent=71 // pred_check_branch
          %2171 = sbr.rel (%p2169) target = $region76
        $region75: #{tpu_custom_call.1} parent=71 // pred_region
          %s2172 = sand.u32 %s258, 1
          %s2173 = scalar_lea.sflag [#allocation3], %s2172
          %s2174 = sand.u32 %s258, 1
          %s2175 = smul.addr %s2174, 64
          %s2176 = scalar_lea.vmem [#allocation2], %s2175
          %2178 = dma.done %s2173, 1024
        $region76: #{tpu_custom_call.1} parent=71 // pred_fallthru
          _
        // Predicated region
        $region77: #{tpu_custom_call.1} parent=71 // pred_check
          %p2179 = pneg %p299
        $region78: #{tpu_custom_call.1} parent=71 // pred_check_branch
          %2181 = sbr.rel (%p2179) target = $region80
        $region79: #{tpu_custom_call.1} parent=71 // pred_region
          %s2182 = sand.u32 %s284, 1
          %s2183 = scalar_lea.sflag [#allocation5], %s2182
          %s2184 = sand.u32 %s284, 1
          %s2185 = smul.addr %s2184, 64
          %s2186 = scalar_lea.vmem [#allocation4], %s2185
          %2188 = dma.done %s2183, 1024
        $region80: #{tpu_custom_call.1} parent=71 // pred_fallthru
          _
      $region72: #{tpu_custom_call.1} parent=5 // pred_fallthru
        _
    $region6: #{tpu_custom_call.1} parent=1 // loop_footer
      %s28 = sadd.s32 1, %s24
    $region7: #{tpu_custom_call.1} parent=1 // loop_footer_branch
      %23 = sbr.rel target = $region3
    $region8: #{tpu_custom_call.1} parent=1 // loop_exit
      _
    %2189 = vsyncpa [#allocation3], 1
    %s2190 = scalar_lea.sflag [#allocation3], 1
    %2191 = vsyncpa %s2190, 1
    %2192 = vsyncpa [#allocation5], 1
    %s2193 = scalar_lea.sflag [#allocation5], 1
    %2194 = vsyncpa %s2193, 1

</llo_original>
